<compile_context>
chip_gen: v7x
topology: tpu7x:2x2x1
jax: 0.10.0
libtpu: 0.0.40
codegen_flags: <defaults>
</compile_context>

<pallas_src>
import functools

import jax
import jax.numpy as jnp
import numpy as np
from jax import lax
from jax.experimental import pallas as pl
from jax.experimental.pallas import tpu as pltpu


# ----------------------------- fused DoubleConv kernel -----------------------------
def _double_conv_kernel(x_ref, w1_ref, b1_ref, w2_ref, b2_ref, o_ref,
                        patch1_ref, mid_ref, patch2_ref):
    # x_ref    : (1, 1, T+4, W2+2, Cin)  pooled, zero-padded, overlapping row tile
    # w1_ref   : (9*Cin,  Cmid)  conv1 weights, BN1 scale folded, rows (dy,dx,ci)
    # w2_ref   : (9*Cmid, Cout)  conv2 weights, BN2 scale folded
    # b1/b2    : (1, C)          folded BN shifts (f32)
    # o_ref    : (1, T, W2, Cout)  channels-last output row tile
    # patch1   : (T+2, W2, 9*Cin)   im2col scratch for conv1 (compute dtype)
    # mid_ref  : (T+2, W2+2, Cmid)  conv1 activation + conv2 zero-pad halo
    # patch2   : (T, W2, 9*Cmid)    im2col scratch for conv2
    _, T, W2, Cout = o_ref.shape
    Cin = x_ref.shape[-1]
    Cmid = mid_ref.shape[-1]
    R1 = T + 2                      # conv1 rows: output tile + 1 halo row each side

    rt = pl.program_id(1)
    num_rt = pl.num_programs(1)

    # ---- conv1 im2col: write each tap slab directly into the patch scratch ----
    for dy in range(3):
        for dx in range(3):
            t = dy * 3 + dx
            patch1_ref[:, :, t * Cin:(t + 1) * Cin] = \
                x_ref[0, 0, dy:dy + R1, dx:dx + W2, :]

    acc1 = jnp.dot(patch1_ref[...].reshape(R1 * W2, 9 * Cin), w1_ref[...],
                   preferred_element_type=jnp.float32)            # (R1*W2, Cmid)
    h1 = jnp.maximum(acc1 + b1_ref[...], 0.0)                     # BN shift + ReLU

    # ---- mid halo buffer: interior <- h1, 1-wide border ring kept zero ----
    mid_ref[:, 1:W2 + 1, :] = h1.reshape(R1, W2, Cmid).astype(mid_ref.dtype)
    zcol = jnp.zeros((R1, 1, Cmid), mid_ref.dtype)
    mid_ref[:, 0:1, :] = zcol                     # conv2 zero padding, left col
    mid_ref[:, W2 + 1:W2 + 2, :] = zcol           # conv2 zero padding, right col

    zrow = jnp.zeros((1, W2 + 2, Cmid), mid_ref.dtype)

    @pl.when(rt == 0)
    def _():                                      # h1 row above the image = padding
        mid_ref[0:1, :, :] = zrow

    @pl.when(rt == num_rt - 1)
    def _():                                      # h1 row below the image = padding
        mid_ref[R1 - 1:R1, :, :] = zrow

    # ---- conv2 im2col + matmul + epilogue ----
    for dy in range(3):
        for dx in range(3):
            t = dy * 3 + dx
            patch2_ref[:, :, t * Cmid:(t + 1) * Cmid] = \
                mid_ref[dy:dy + T, dx:dx + W2, :]

    acc2 = jnp.dot(patch2_ref[...].reshape(T * W2, 9 * Cmid), w2_ref[...],
                   preferred_element_type=jnp.float32)            # (T*W2, Cout)
    y = jnp.maximum(acc2 + b2_ref[...], 0.0)
    o_ref[0] = y.reshape(T, W2, Cout).astype(o_ref.dtype)


# --------------------------------- tile sizing ---------------------------------
def _vmem_bytes(T, W2, Cin, Cmid, Cout, cmp_isz, out_isz):
    xin = 2 * (T + 4) * (W2 + 2) * Cin * cmp_isz          # double-buffered input tile
    p1 = (T + 2) * W2 * 9 * Cin * cmp_isz                 # conv1 patch
    mid = (T + 2) * (W2 + 2) * Cmid * cmp_isz             # mid activation + halo
    p2 = T * W2 * 9 * Cmid * cmp_isz                      # conv2 patch
    yo = 2 * T * W2 * Cout * out_isz                      # double-buffered output tile
    wts = 2 * (9 * Cin * Cmid + 9 * Cmid * Cout) * cmp_isz + 4 * (Cmid + Cout) * 4
    return xin + p1 + mid + p2 + yo + wts


def _pick_row_tile(H2, W2, Cin, Cmid, Cout, cmp_isz, out_isz, budget):
    for t in sorted((d for d in range(1, H2 + 1) if H2 % d == 0), reverse=True):
        if _vmem_bytes(t, W2, Cin, Cmid, Cout, cmp_isz, out_isz) <= budget:
            return t
    return 1


# ----------------------------------- wrapper -----------------------------------
def down_forward(x_nchw, params, *, row_tile=None,
                 compute_dtype=jnp.bfloat16,
                 vmem_budget_bytes=24 * 1024 * 1024):
    N, Cin, H, W = x_nchw.shape
    H2, W2 = H // 2, W // 2
    w1p = params["w1_packed"].astype(compute_dtype)       # (9*Cin,  Cmid), BN1-scaled
    w2p = params["w2_packed"].astype(compute_dtype)       # (9*Cmid, Cout), BN2-scaled
    b1 = params["bn1_shift"]                              # (1, Cmid) f32
    b2 = params["bn2_shift"]                              # (1, Cout) f32
    Cmid = w1p.shape[1]
    Cout = w2p.shape[1]

    cmp_isz = np.dtype(compute_dtype).itemsize
    out_isz = np.dtype(x_nchw.dtype).itemsize

    if row_tile is None:
        T = _pick_row_tile(H2, W2, Cin, Cmid, Cout, cmp_isz, out_isz, vmem_budget_bytes)
    else:
        T = int(row_tile)
    assert H2 % T == 0, f"row_tile={T} must divide pooled height {H2}"
    RT = H2 // T

    # 1) 2x2 max pool in XLA on NCHW (layout preserving) -- shrinks the tensor 4x
    #    before any layout change, cutting input-side HBM traffic.
    pooled = lax.reduce_window(x_nchw, -jnp.inf, lax.max,
                               (1, 1, 2, 2), (1, 1, 2, 2), "VALID")   # (N,Cin,H2,W2)
    # 2) channels-last + zero pad: 2 halo rows each side (conv1+conv2 edge halos)
    #    and 1 halo column each side (conv1 width padding).
    xp = jnp.transpose(pooled, (0, 2, 3, 1))                          # (N,H2,W2,Cin)
    xp = jnp.pad(xp, ((0, 0), (2, 2), (1, 1), (0, 0)))                # (N,H2+4,W2+2,Cin)
    xp = xp.astype(compute_dtype)
    # 3) overlapping (T+4)-row windows materialized in HBM so plain non-overlapping
    #    BlockSpecs auto-pipeline them (halo duplication is only 4 rows per tile).
    row_idx = jnp.arange(RT)[:, None] * T + jnp.arange(T + 4)[None, :]
    xo = xp[:, row_idx]                                               # (N,RT,T+4,W2+2,Cin)

    est = _vmem_bytes(T, W2, Cin, Cmid, Cout, cmp_isz, out_isz)
    vmem_limit = int(min(64 * 1024 * 1024, max(32 * 1024 * 1024, 2 * est)))

    out_nhwc = pl.pallas_call(
        _double_conv_kernel,
        out_shape=jax.ShapeDtypeStruct((N, H2, W2, Cout), x_nchw.dtype),
        grid=(N, RT),
        in_specs=[
            pl.BlockSpec((1, 1, T + 4, W2 + 2, Cin), lambda n, r: (n, r, 0, 0, 0)),
            # Constant operands (weights / BN shifts): constant index_map -> fetched once.
            # TODO(synk): single-buffer these via pipeline_mode=pl.Buffered(1) once that
            # BlockSpec kwarg is verified on the target jax version.
            pl.BlockSpec((9 * Cin, Cmid), lambda n, r: (0, 0)),
            pl.BlockSpec((1, Cmid), lambda n, r: (0, 0)),
            pl.BlockSpec((9 * Cmid, Cout), lambda n, r: (0, 0)),
            pl.BlockSpec((1, Cout), lambda n, r: (0, 0)),
        ],
        out_specs=pl.BlockSpec((1, T, W2, Cout), lambda n, r: (n, r, 0, 0)),
        scratch_shapes=[
            pltpu.VMEM((T + 2, W2, 9 * Cin), compute_dtype),      # conv1 im2col patch
            pltpu.VMEM((T + 2, W2 + 2, Cmid), compute_dtype),     # conv1 act + halo
            pltpu.VMEM((T, W2, 9 * Cmid), compute_dtype),         # conv2 im2col patch
        ],
        compiler_params=pltpu.CompilerParams(
            dimension_semantics=("parallel", "parallel"),
            vmem_limit_bytes=vmem_limit),
    )(xo, w1p, b1, w2p, b2)

    # NCHW transpose in XLA on the small output instead of an in-kernel y.T.
    return jnp.transpose(out_nhwc, (0, 3, 1, 2))


# ----------------------------------- params -----------------------------------
def init_down_params(key, in_channels, out_channels, eps=1e-5):
    mid_channels = out_channels
    k1, k2 = jax.random.split(key)
    # PyTorch conv weights are OIHW.
    w1_oihw = 0.1 * jax.random.normal(k1, (mid_channels, in_channels, 3, 3), jnp.float32)
    w2_oihw = 0.1 * jax.random.normal(k2, (out_channels, mid_channels, 3, 3), jnp.float32)

    def bn_fold(c):
        # BatchNorm2d default init, eval mode: gamma=1, beta=0, mean=0, var=1.
        gamma = jnp.ones((c,), jnp.float32)
        beta = jnp.zeros((c,), jnp.float32)
        mean = jnp.zeros((c,), jnp.float32)
        var = jnp.ones((c,), jnp.float32)
        scale = gamma / jnp.sqrt(var + eps)
        shift = beta - mean * scale
        return scale, shift

    def pack(w_oihw, scale):
        # (O,I,3,3) -> (ky,kx,ci,co) -> (9*I, O); row order matches the kernel's
        # im2col column order (tap-major, input-channel-minor). BN scale folded
        # into each output-channel column.
        o, i, _, _ = w_oihw.shape
        w = jnp.transpose(w_oihw, (2, 3, 1, 0)).reshape(9 * i, o)
        return w * scale[None, :]

    s1, b1 = bn_fold(mid_channels)
    s2, b2 = bn_fold(out_channels)
    return {
        "w1_oihw": w1_oihw, "w2_oihw": w2_oihw,
        "w1_packed": pack(w1_oihw, s1), "w2_packed": pack(w2_oihw, s2),
        "bn1_shift": b1.reshape(1, mid_channels),
        "bn2_shift": b2.reshape(1, out_channels),
    }


# ------------------------------ pure-JAX reference ------------------------------
def down_reference(x_nchw, params, eps=1e-5):
    p = lax.reduce_window(x_nchw, -jnp.inf, lax.max,
                          (1, 1, 2, 2), (1, 1, 2, 2), "VALID")

    def conv_bn_relu(x, w_oihw):
        y = lax.conv_general_dilated(
            x, w_oihw, window_strides=(1, 1), padding="SAME",
            dimension_numbers=("NCHW", "OIHW", "NCHW"))
        y = y / jnp.sqrt(1.0 + eps)   # BN eval with default stats / affine
        return jnp.maximum(y, 0.0)

    return conv_bn_relu(conv_bn_relu(p, params["w1_oihw"]), params["w2_oihw"])


if __name__ == "__main__":
    key = jax.random.PRNGKey(0)
    kx, kp = jax.random.split(key)

    N, Cin, Cout, H, W = 2, 4, 8, 16, 16
    x = jax.random.normal(kx, (N, Cin, H, W), jnp.float32)
    params = init_down_params(kp, Cin, Cout)

    ref = jax.block_until_ready(down_reference(x, params))

    # Multi-row-tile path: exercises the halo recompute and edge-row zeroing.
    fwd_tiled = jax.jit(functools.partial(down_forward, row_tile=4))
    out_tiled = jax.block_until_ready(fwd_tiled(x, params))
    assert out_tiled.shape == (N, Cout, H // 2, W // 2), out_tiled.shape
    np.testing.assert_allclose(np.asarray(out_tiled), np.asarray(ref),
                               rtol=5e-2, atol=5e-2)   # bf16 compute path

    # Auto-picked row tile (single tile at this toy size).
    fwd_auto = jax.jit(down_forward)
    out_auto = jax.block_until_ready(fwd_auto(x, params))
    np.testing.assert_allclose(np.asarray(out_auto), np.asarray(ref),
                               rtol=5e-2, atol=5e-2)

    print("KERNEL_OK")
</pallas_src>

<mosaic_0001>
module attributes {stable_mosaic.version = 11 : i64} {
  func.func @_double_conv_kernel(%arg0: i32, %arg1: i32, %arg2: memref<1x1x8x10x4xbf16, #tpu.memory_space<vmem>>, %arg3: memref<36x8xbf16, #tpu.memory_space<vmem>>, %arg4: memref<1x8xf32, #tpu.memory_space<vmem>>, %arg5: memref<72x8xbf16, #tpu.memory_space<vmem>>, %arg6: memref<1x8xf32, #tpu.memory_space<vmem>>, %arg7: memref<1x4x8x8xf32, #tpu.memory_space<vmem>>, %arg8: memref<6x8x36xbf16, #tpu.memory_space<vmem>>, %arg9: memref<6x10x8xbf16, #tpu.memory_space<vmem>>, %arg10: memref<4x8x72xbf16, #tpu.memory_space<vmem>>) attributes {dimension_semantics = [#tpu.dimension_semantics<parallel>, #tpu.dimension_semantics<parallel>], iteration_bounds = array<i64: 2, 2>, scalar_prefetch = 0 : i64, scratch_operands = 3 : i64, tpu.core_type = #tpu.core_type<tc>, window_params = [{transform_indices = @transform_0, window_bounds = array<i64: 1, 1, 8, 10, 4>}, {pipeline_mode = #tpu.pipeline_mode<synchronous>, transform_indices = @transform_1, window_bounds = array<i64: 36, 8>}, {pipeline_mode = #tpu.pipeline_mode<synchronous>, transform_indices = @transform_2, window_bounds = array<i64: 1, 8>}, {pipeline_mode = #tpu.pipeline_mode<synchronous>, transform_indices = @transform_3, window_bounds = array<i64: 72, 8>}, {pipeline_mode = #tpu.pipeline_mode<synchronous>, transform_indices = @transform_4, window_bounds = array<i64: 1, 8>}, {transform_indices = @transform_5, window_bounds = array<i64: 1, 4, 8, 8>}]} {
    %c0 = arith.constant 0 : index
    %c0_0 = arith.constant 0 : index
    %c0_1 = arith.constant 0 : index
    %c0_2 = arith.constant 0 : index
    %c0_3 = arith.constant 0 : index
    %0 = vector.load %arg2[%c0, %c0_0, %c0_1, %c0_2, %c0_3] : memref<1x1x8x10x4xbf16, #tpu.memory_space<vmem>>, vector<1x1x6x8x4xbf16>
    %1 = vector.shape_cast %0 : vector<1x1x6x8x4xbf16> to vector<6x8x4xbf16>
    %c0_4 = arith.constant 0 : index
    %c0_5 = arith.constant 0 : index
    %c0_6 = arith.constant 0 : index
    %2 = vector.load %arg8[%c0_4, %c0_5, %c0_6] : memref<6x8x36xbf16, #tpu.memory_space<vmem>>, vector<6x8x4xbf16>
    tpu.vector_store %arg8[%c0_4, %c0_5, %c0_6], %1 {strides = array<i32>} : memref<6x8x36xbf16, #tpu.memory_space<vmem>>, vector<6x8x4xbf16>,
    %c0_7 = arith.constant 0 : index
    %c0_8 = arith.constant 0 : index
    %c0_9 = arith.constant 0 : index
    %c1 = arith.constant 1 : index
    %c0_10 = arith.constant 0 : index
    %3 = vector.load %arg2[%c0_7, %c0_8, %c0_9, %c1, %c0_10] : memref<1x1x8x10x4xbf16, #tpu.memory_space<vmem>>, vector<1x1x6x8x4xbf16>
    %4 = vector.shape_cast %3 : vector<1x1x6x8x4xbf16> to vector<6x8x4xbf16>
    %c0_11 = arith.constant 0 : index
    %c0_12 = arith.constant 0 : index
    %c4 = arith.constant 4 : index
    %5 = vector.load %arg8[%c0_11, %c0_12, %c4] : memref<6x8x36xbf16, #tpu.memory_space<vmem>>, vector<6x8x4xbf16>
    tpu.vector_store %arg8[%c0_11, %c0_12, %c4], %4 {strides = array<i32>} : memref<6x8x36xbf16, #tpu.memory_space<vmem>>, vector<6x8x4xbf16>,
    %c0_13 = arith.constant 0 : index
    %c0_14 = arith.constant 0 : index
    %c0_15 = arith.constant 0 : index
    %c2 = arith.constant 2 : index
    %c0_16 = arith.constant 0 : index
    %6 = vector.load %arg2[%c0_13, %c0_14, %c0_15, %c2, %c0_16] : memref<1x1x8x10x4xbf16, #tpu.memory_space<vmem>>, vector<1x1x6x8x4xbf16>
    %7 = vector.shape_cast %6 : vector<1x1x6x8x4xbf16> to vector<6x8x4xbf16>
    %c0_17 = arith.constant 0 : index
    %c0_18 = arith.constant 0 : index
    %c8 = arith.constant 8 : index
    %8 = vector.load %arg8[%c0_17, %c0_18, %c8] : memref<6x8x36xbf16, #tpu.memory_space<vmem>>, vector<6x8x4xbf16>
    tpu.vector_store %arg8[%c0_17, %c0_18, %c8], %7 {strides = array<i32>} : memref<6x8x36xbf16, #tpu.memory_space<vmem>>, vector<6x8x4xbf16>,
    %c0_19 = arith.constant 0 : index
    %c0_20 = arith.constant 0 : index
    %c1_21 = arith.constant 1 : index
    %c0_22 = arith.constant 0 : index
    %c0_23 = arith.constant 0 : index
    %9 = vector.load %arg2[%c0_19, %c0_20, %c1_21, %c0_22, %c0_23] : memref<1x1x8x10x4xbf16, #tpu.memory_space<vmem>>, vector<1x1x6x8x4xbf16>
    %10 = vector.shape_cast %9 : vector<1x1x6x8x4xbf16> to vector<6x8x4xbf16>
    %c0_24 = arith.constant 0 : index
    %c0_25 = arith.constant 0 : index
    %c12 = arith.constant 12 : index
    %11 = vector.load %arg8[%c0_24, %c0_25, %c12] : memref<6x8x36xbf16, #tpu.memory_space<vmem>>, vector<6x8x4xbf16>
    tpu.vector_store %arg8[%c0_24, %c0_25, %c12], %10 {strides = array<i32>} : memref<6x8x36xbf16, #tpu.memory_space<vmem>>, vector<6x8x4xbf16>,
    %c0_26 = arith.constant 0 : index
    %c0_27 = arith.constant 0 : index
    %c1_28 = arith.constant 1 : index
    %c1_29 = arith.constant 1 : index
    %c0_30 = arith.constant 0 : index
    %12 = vector.load %arg2[%c0_26, %c0_27, %c1_28, %c1_29, %c0_30] : memref<1x1x8x10x4xbf16, #tpu.memory_space<vmem>>, vector<1x1x6x8x4xbf16>
    %13 = vector.shape_cast %12 : vector<1x1x6x8x4xbf16> to vector<6x8x4xbf16>
    %c0_31 = arith.constant 0 : index
    %c0_32 = arith.constant 0 : index
    %c16 = arith.constant 16 : index
    %14 = vector.load %arg8[%c0_31, %c0_32, %c16] : memref<6x8x36xbf16, #tpu.memory_space<vmem>>, vector<6x8x4xbf16>
    tpu.vector_store %arg8[%c0_31, %c0_32, %c16], %13 {strides = array<i32>} : memref<6x8x36xbf16, #tpu.memory_space<vmem>>, vector<6x8x4xbf16>,
    %c0_33 = arith.constant 0 : index
    %c0_34 = arith.constant 0 : index
    %c1_35 = arith.constant 1 : index
    %c2_36 = arith.constant 2 : index
    %c0_37 = arith.constant 0 : index
    %15 = vector.load %arg2[%c0_33, %c0_34, %c1_35, %c2_36, %c0_37] : memref<1x1x8x10x4xbf16, #tpu.memory_space<vmem>>, vector<1x1x6x8x4xbf16>
    %16 = vector.shape_cast %15 : vector<1x1x6x8x4xbf16> to vector<6x8x4xbf16>
    %c0_38 = arith.constant 0 : index
    %c0_39 = arith.constant 0 : index
    %c20 = arith.constant 20 : index
    %17 = vector.load %arg8[%c0_38, %c0_39, %c20] : memref<6x8x36xbf16, #tpu.memory_space<vmem>>, vector<6x8x4xbf16>
    tpu.vector_store %arg8[%c0_38, %c0_39, %c20], %16 {strides = array<i32>} : memref<6x8x36xbf16, #tpu.memory_space<vmem>>, vector<6x8x4xbf16>,
    %c0_40 = arith.constant 0 : index
    %c0_41 = arith.constant 0 : index
    %c2_42 = arith.constant 2 : index
    %c0_43 = arith.constant 0 : index
    %c0_44 = arith.constant 0 : index
    %18 = vector.load %arg2[%c0_40, %c0_41, %c2_42, %c0_43, %c0_44] : memref<1x1x8x10x4xbf16, #tpu.memory_space<vmem>>, vector<1x1x6x8x4xbf16>
    %19 = vector.shape_cast %18 : vector<1x1x6x8x4xbf16> to vector<6x8x4xbf16>
    %c0_45 = arith.constant 0 : index
    %c0_46 = arith.constant 0 : index
    %c24 = arith.constant 24 : index
    %20 = vector.load %arg8[%c0_45, %c0_46, %c24] : memref<6x8x36xbf16, #tpu.memory_space<vmem>>, vector<6x8x4xbf16>
    tpu.vector_store %arg8[%c0_45, %c0_46, %c24], %19 {strides = array<i32>} : memref<6x8x36xbf16, #tpu.memory_space<vmem>>, vector<6x8x4xbf16>,
    %c0_47 = arith.constant 0 : index
    %c0_48 = arith.constant 0 : index
    %c2_49 = arith.constant 2 : index
    %c1_50 = arith.constant 1 : index
    %c0_51 = arith.constant 0 : index
    %21 = vector.load %arg2[%c0_47, %c0_48, %c2_49, %c1_50, %c0_51] : memref<1x1x8x10x4xbf16, #tpu.memory_space<vmem>>, vector<1x1x6x8x4xbf16>
    %22 = vector.shape_cast %21 : vector<1x1x6x8x4xbf16> to vector<6x8x4xbf16>
    %c0_52 = arith.constant 0 : index
    %c0_53 = arith.constant 0 : index
    %c28 = arith.constant 28 : index
    %23 = vector.load %arg8[%c0_52, %c0_53, %c28] : memref<6x8x36xbf16, #tpu.memory_space<vmem>>, vector<6x8x4xbf16>
    tpu.vector_store %arg8[%c0_52, %c0_53, %c28], %22 {strides = array<i32>} : memref<6x8x36xbf16, #tpu.memory_space<vmem>>, vector<6x8x4xbf16>,
    %c0_54 = arith.constant 0 : index
    %c0_55 = arith.constant 0 : index
    %c2_56 = arith.constant 2 : index
    %c2_57 = arith.constant 2 : index
    %c0_58 = arith.constant 0 : index
    %24 = vector.load %arg2[%c0_54, %c0_55, %c2_56, %c2_57, %c0_58] : memref<1x1x8x10x4xbf16, #tpu.memory_space<vmem>>, vector<1x1x6x8x4xbf16>
    %25 = vector.shape_cast %24 : vector<1x1x6x8x4xbf16> to vector<6x8x4xbf16>
    %c0_59 = arith.constant 0 : index
    %c0_60 = arith.constant 0 : index
    %c32 = arith.constant 32 : index
    %26 = vector.load %arg8[%c0_59, %c0_60, %c32] : memref<6x8x36xbf16, #tpu.memory_space<vmem>>, vector<6x8x4xbf16>
    tpu.vector_store %arg8[%c0_59, %c0_60, %c32], %25 {strides = array<i32>} : memref<6x8x36xbf16, #tpu.memory_space<vmem>>, vector<6x8x4xbf16>,
    %c0_61 = arith.constant 0 : index
    %c0_62 = arith.constant 0 : index
    %c0_63 = arith.constant 0 : index
    %27 = vector.load %arg8[%c0_61, %c0_62, %c0_63] : memref<6x8x36xbf16, #tpu.memory_space<vmem>>, vector<6x8x36xbf16>
    %28 = vector.shape_cast %27 : vector<6x8x36xbf16> to vector<48x36xbf16>
    %c0_64 = arith.constant 0 : index
    %c0_65 = arith.constant 0 : index
    %29 = vector.load %arg3[%c0_64, %c0_65] : memref<36x8xbf16, #tpu.memory_space<vmem>>, vector<36x8xbf16>
    %cst = arith.constant dense<0.000000e+00> : vector<48x8xf32>
    %30 = tpu.matmul %28, %29, %cst {dimension_numbers = #tpu.dot_dimension_numbers<[1], [0], [0], [1], [0, 0, 1, 1], [], []>} : vector<48x36xbf16>, vector<36x8xbf16>, vector<48x8xf32> -> vector<48x8xf32>
    %c0_66 = arith.constant 0 : index
    %c0_67 = arith.constant 0 : index
    %31 = vector.load %arg4[%c0_66, %c0_67] : memref<1x8xf32, #tpu.memory_space<vmem>>, vector<1x8xf32>
    %32 = vector.broadcast %31 : vector<1x8xf32> to vector<48x8xf32>
    %33 = arith.addf %30, %32 : vector<48x8xf32>
    %cst_68 = arith.constant 0.000000e+00 : f32
    %34 = vector.broadcast %cst_68 : f32 to vector<48x8xf32>
    %35 = arith.maximumf %33, %34 : vector<48x8xf32>
    %36 = vector.shape_cast %35 : vector<48x8xf32> to vector<6x8x8xf32>
    %37 = arith.truncf %36 : vector<6x8x8xf32> to vector<6x8x8xbf16>
    %c0_69 = arith.constant 0 : index
    %c1_70 = arith.constant 1 : index
    %c0_71 = arith.constant 0 : index
    %38 = vector.load %arg9[%c0_69, %c1_70, %c0_71] : memref<6x10x8xbf16, #tpu.memory_space<vmem>>, vector<6x8x8xbf16>
    tpu.vector_store %arg9[%c0_69, %c1_70, %c0_71], %37 {strides = array<i32>} : memref<6x10x8xbf16, #tpu.memory_space<vmem>>, vector<6x8x8xbf16>,
    %cst_72 = arith.constant 0.000000e+00 : bf16
    %39 = vector.broadcast %cst_72 : bf16 to vector<6x1x8xbf16>
    %c0_73 = arith.constant 0 : index
    %c0_74 = arith.constant 0 : index
    %c0_75 = arith.constant 0 : index
    %40 = vector.load %arg9[%c0_73, %c0_74, %c0_75] : memref<6x10x8xbf16, #tpu.memory_space<vmem>>, vector<6x1x8xbf16>
    tpu.vector_store %arg9[%c0_73, %c0_74, %c0_75], %39 {strides = array<i32>} : memref<6x10x8xbf16, #tpu.memory_space<vmem>>, vector<6x1x8xbf16>,
    %c0_76 = arith.constant 0 : index
    %c9 = arith.constant 9 : index
    %c0_77 = arith.constant 0 : index
    %41 = vector.load %arg9[%c0_76, %c9, %c0_77] : memref<6x10x8xbf16, #tpu.memory_space<vmem>>, vector<6x1x8xbf16>
    tpu.vector_store %arg9[%c0_76, %c9, %c0_77], %39 {strides = array<i32>} : memref<6x10x8xbf16, #tpu.memory_space<vmem>>, vector<6x1x8xbf16>,
    %cst_78 = arith.constant 0.000000e+00 : bf16
    %42 = vector.broadcast %cst_78 : bf16 to vector<1x10x8xbf16>
    %c0_i32 = arith.constant 0 : i32
    %43 = arith.cmpi eq, %arg1, %c0_i32 : i32
    %44 = arith.extui %43 : i1 to i32
    %c0_i32_79 = arith.constant 0 : i32
    %45 = arith.cmpi ne, %44, %c0_i32_79 : i32
    scf.if %45 {
      %c0_144 = arith.constant 0 : index
      %c0_145 = arith.constant 0 : index
      %c0_146 = arith.constant 0 : index
      %80 = vector.load %arg9[%c0_144, %c0_145, %c0_146] : memref<6x10x8xbf16, #tpu.memory_space<vmem>>, vector<1x10x8xbf16>
      tpu.vector_store %arg9[%c0_144, %c0_145, %c0_146], %42 {strides = array<i32>} : memref<6x10x8xbf16, #tpu.memory_space<vmem>>, vector<1x10x8xbf16>,
    } else {
    }
    %c1_i32 = arith.constant 1 : i32
    %46 = arith.cmpi eq, %arg1, %c1_i32 : i32
    %47 = arith.extui %46 : i1 to i32
    %c0_i32_80 = arith.constant 0 : i32
    %48 = arith.cmpi ne, %47, %c0_i32_80 : i32
    scf.if %48 {
      %c5 = arith.constant 5 : index
      %c0_144 = arith.constant 0 : index
      %c0_145 = arith.constant 0 : index
      %80 = vector.load %arg9[%c5, %c0_144, %c0_145] : memref<6x10x8xbf16, #tpu.memory_space<vmem>>, vector<1x10x8xbf16>
      tpu.vector_store %arg9[%c5, %c0_144, %c0_145], %42 {strides = array<i32>} : memref<6x10x8xbf16, #tpu.memory_space<vmem>>, vector<1x10x8xbf16>,
    } else {
    }
    %c0_81 = arith.constant 0 : index
    %c0_82 = arith.constant 0 : index
    %c0_83 = arith.constant 0 : index
    %49 = vector.load %arg9[%c0_81, %c0_82, %c0_83] : memref<6x10x8xbf16, #tpu.memory_space<vmem>>, vector<4x8x8xbf16>
    %c0_84 = arith.constant 0 : index
    %c0_85 = arith.constant 0 : index
    %c0_86 = arith.constant 0 : index
    %50 = vector.load %arg10[%c0_84, %c0_85, %c0_86] : memref<4x8x72xbf16, #tpu.memory_space<vmem>>, vector<4x8x8xbf16>
    tpu.vector_store %arg10[%c0_84, %c0_85, %c0_86], %49 {strides = array<i32>} : memref<4x8x72xbf16, #tpu.memory_space<vmem>>, vector<4x8x8xbf16>,
    %c0_87 = arith.constant 0 : index
    %c1_88 = arith.constant 1 : index
    %c0_89 = arith.constant 0 : index
    %51 = vector.load %arg9[%c0_87, %c1_88, %c0_89] : memref<6x10x8xbf16, #tpu.memory_space<vmem>>, vector<4x8x8xbf16>
    %c0_90 = arith.constant 0 : index
    %c0_91 = arith.constant 0 : index
    %c8_92 = arith.constant 8 : index
    %52 = vector.load %arg10[%c0_90, %c0_91, %c8_92] : memref<4x8x72xbf16, #tpu.memory_space<vmem>>, vector<4x8x8xbf16>
    tpu.vector_store %arg10[%c0_90, %c0_91, %c8_92], %51 {strides = array<i32>} : memref<4x8x72xbf16, #tpu.memory_space<vmem>>, vector<4x8x8xbf16>,
    %c0_93 = arith.constant 0 : index
    %c2_94 = arith.constant 2 : index
    %c0_95 = arith.constant 0 : index
    %53 = vector.load %arg9[%c0_93, %c2_94, %c0_95] : memref<6x10x8xbf16, #tpu.memory_space<vmem>>, vector<4x8x8xbf16>
    %c0_96 = arith.constant 0 : index
    %c0_97 = arith.constant 0 : index
    %c16_98 = arith.constant 16 : index
    %54 = vector.load %arg10[%c0_96, %c0_97, %c16_98] : memref<4x8x72xbf16, #tpu.memory_space<vmem>>, vector<4x8x8xbf16>
    tpu.vector_store %arg10[%c0_96, %c0_97, %c16_98], %53 {strides = array<i32>} : memref<4x8x72xbf16, #tpu.memory_space<vmem>>, vector<4x8x8xbf16>,
    %c1_99 = arith.constant 1 : index
    %c0_100 = arith.constant 0 : index
    %c0_101 = arith.constant 0 : index
    %55 = vector.load %arg9[%c1_99, %c0_100, %c0_101] : memref<6x10x8xbf16, #tpu.memory_space<vmem>>, vector<4x8x8xbf16>
    %c0_102 = arith.constant 0 : index
    %c0_103 = arith.constant 0 : index
    %c24_104 = arith.constant 24 : index
    %56 = vector.load %arg10[%c0_102, %c0_103, %c24_104] : memref<4x8x72xbf16, #tpu.memory_space<vmem>>, vector<4x8x8xbf16>
    tpu.vector_store %arg10[%c0_102, %c0_103, %c24_104], %55 {strides = array<i32>} : memref<4x8x72xbf16, #tpu.memory_space<vmem>>, vector<4x8x8xbf16>,
    %c1_105 = arith.constant 1 : index
    %c1_106 = arith.constant 1 : index
    %c0_107 = arith.constant 0 : index
    %57 = vector.load %arg9[%c1_105, %c1_106, %c0_107] : memref<6x10x8xbf16, #tpu.memory_space<vmem>>, vector<4x8x8xbf16>
    %c0_108 = arith.constant 0 : index
    %c0_109 = arith.constant 0 : index
    %c32_110 = arith.constant 32 : index
    %58 = vector.load %arg10[%c0_108, %c0_109, %c32_110] : memref<4x8x72xbf16, #tpu.memory_space<vmem>>, vector<4x8x8xbf16>
    tpu.vector_store %arg10[%c0_108, %c0_109, %c32_110], %57 {strides = array<i32>} : memref<4x8x72xbf16, #tpu.memory_space<vmem>>, vector<4x8x8xbf16>,
    %c1_111 = arith.constant 1 : index
    %c2_112 = arith.constant 2 : index
    %c0_113 = arith.constant 0 : index
    %59 = vector.load %arg9[%c1_111, %c2_112, %c0_113] : memref<6x10x8xbf16, #tpu.memory_space<vmem>>, vector<4x8x8xbf16>
    %c0_114 = arith.constant 0 : index
    %c0_115 = arith.constant 0 : index
    %c40 = arith.constant 40 : index
    %60 = vector.load %arg10[%c0_114, %c0_115, %c40] : memref<4x8x72xbf16, #tpu.memory_space<vmem>>, vector<4x8x8xbf16>
    tpu.vector_store %arg10[%c0_114, %c0_115, %c40], %59 {strides = array<i32>} : memref<4x8x72xbf16, #tpu.memory_space<vmem>>, vector<4x8x8xbf16>,
    %c2_116 = arith.constant 2 : index
    %c0_117 = arith.constant 0 : index
    %c0_118 = arith.constant 0 : index
    %61 = vector.load %arg9[%c2_116, %c0_117, %c0_118] : memref<6x10x8xbf16, #tpu.memory_space<vmem>>, vector<4x8x8xbf16>
    %c0_119 = arith.constant 0 : index
    %c0_120 = arith.constant 0 : index
    %c48 = arith.constant 48 : index
    %62 = vector.load %arg10[%c0_119, %c0_120, %c48] : memref<4x8x72xbf16, #tpu.memory_space<vmem>>, vector<4x8x8xbf16>
    tpu.vector_store %arg10[%c0_119, %c0_120, %c48], %61 {strides = array<i32>} : memref<4x8x72xbf16, #tpu.memory_space<vmem>>, vector<4x8x8xbf16>,
    %c2_121 = arith.constant 2 : index
    %c1_122 = arith.constant 1 : index
    %c0_123 = arith.constant 0 : index
    %63 = vector.load %arg9[%c2_121, %c1_122, %c0_123] : memref<6x10x8xbf16, #tpu.memory_space<vmem>>, vector<4x8x8xbf16>
    %c0_124 = arith.constant 0 : index
    %c0_125 = arith.constant 0 : index
    %c56 = arith.constant 56 : index
    %64 = vector.load %arg10[%c0_124, %c0_125, %c56] : memref<4x8x72xbf16, #tpu.memory_space<vmem>>, vector<4x8x8xbf16>
    tpu.vector_store %arg10[%c0_124, %c0_125, %c56], %63 {strides = array<i32>} : memref<4x8x72xbf16, #tpu.memory_space<vmem>>, vector<4x8x8xbf16>,
    %c2_126 = arith.constant 2 : index
    %c2_127 = arith.constant 2 : index
    %c0_128 = arith.constant 0 : index
    %65 = vector.load %arg9[%c2_126, %c2_127, %c0_128] : memref<6x10x8xbf16, #tpu.memory_space<vmem>>, vector<4x8x8xbf16>
    %c0_129 = arith.constant 0 : index
    %c0_130 = arith.constant 0 : index
    %c64 = arith.constant 64 : index
    %66 = vector.load %arg10[%c0_129, %c0_130, %c64] : memref<4x8x72xbf16, #tpu.memory_space<vmem>>, vector<4x8x8xbf16>
    tpu.vector_store %arg10[%c0_129, %c0_130, %c64], %65 {strides = array<i32>} : memref<4x8x72xbf16, #tpu.memory_space<vmem>>, vector<4x8x8xbf16>,
    %c0_131 = arith.constant 0 : index
    %c0_132 = arith.constant 0 : index
    %c0_133 = arith.constant 0 : index
    %67 = vector.load %arg10[%c0_131, %c0_132, %c0_133] : memref<4x8x72xbf16, #tpu.memory_space<vmem>>, vector<4x8x72xbf16>
    %68 = vector.shape_cast %67 : vector<4x8x72xbf16> to vector<32x72xbf16>
    %c0_134 = arith.constant 0 : index
    %c0_135 = arith.constant 0 : index
    %69 = vector.load %arg5[%c0_134, %c0_135] : memref<72x8xbf16, #tpu.memory_space<vmem>>, vector<72x8xbf16>
    %cst_136 = arith.constant dense<0.000000e+00> : vector<32x8xf32>
    %70 = tpu.matmul %68, %69, %cst_136 {dimension_numbers = #tpu.dot_dimension_numbers<[1], [0], [0], [1], [0, 0, 1, 1], [], []>} : vector<32x72xbf16>, vector<72x8xbf16>, vector<32x8xf32> -> vector<32x8xf32>
    %c0_137 = arith.constant 0 : index
    %c0_138 = arith.constant 0 : index
    %71 = vector.load %arg6[%c0_137, %c0_138] : memref<1x8xf32, #tpu.memory_space<vmem>>, vector<1x8xf32>
    %72 = vector.broadcast %71 : vector<1x8xf32> to vector<32x8xf32>
    %73 = arith.addf %70, %72 : vector<32x8xf32>
    %cst_139 = arith.constant 0.000000e+00 : f32
    %74 = vector.broadcast %cst_139 : f32 to vector<32x8xf32>
    %75 = arith.maximumf %73, %74 : vector<32x8xf32>
    %76 = vector.shape_cast %75 : vector<32x8xf32> to vector<4x8x8xf32>
    %c0_140 = arith.constant 0 : index
    %c0_141 = arith.constant 0 : index
    %c0_142 = arith.constant 0 : index
    %c0_143 = arith.constant 0 : index
    %77 = vector.load %arg7[%c0_140, %c0_141, %c0_142, %c0_143] : memref<1x4x8x8xf32, #tpu.memory_space<vmem>>, vector<1x4x8x8xf32>
    %78 = vector.shape_cast %77 : vector<1x4x8x8xf32> to vector<4x8x8xf32>
    %79 = vector.shape_cast %76 : vector<4x8x8xf32> to vector<1x4x8x8xf32>
    tpu.vector_store %arg7[%c0_140, %c0_141, %c0_142, %c0_143], %79 {strides = array<i32>} : memref<1x4x8x8xf32, #tpu.memory_space<vmem>>, vector<1x4x8x8xf32>,
    return
  }
  func.func @transform_0(%arg0: i32, %arg1: i32) -> (i32, i32, i32, i32, i32) {
    %c0_i32 = arith.constant 0 : i32
    %c0_i32_0 = arith.constant 0 : i32
    %c0_i32_1 = arith.constant 0 : i32
    %c0_i32_2 = arith.constant 0 : i32
    return %arg0, %arg1, %c0_i32, %c0_i32_0, %c0_i32_1 : i32, i32, i32, i32, i32
  }
  func.func @transform_1(%arg0: i32, %arg1: i32) -> (i32, i32) {
    %c0_i32 = arith.constant 0 : i32
    %c0_i32_0 = arith.constant 0 : i32
    %c0_i32_1 = arith.constant 0 : i32
    return %c0_i32, %c0_i32_0 : i32, i32
  }
  func.func @transform_2(%arg0: i32, %arg1: i32) -> (i32, i32) {
    %c0_i32 = arith.constant 0 : i32
    %c0_i32_0 = arith.constant 0 : i32
    %c0_i32_1 = arith.constant 0 : i32
    return %c0_i32, %c0_i32_0 : i32, i32
  }
  func.func @transform_3(%arg0: i32, %arg1: i32) -> (i32, i32) {
    %c0_i32 = arith.constant 0 : i32
    %c0_i32_0 = arith.constant 0 : i32
    %c0_i32_1 = arith.constant 0 : i32
    return %c0_i32, %c0_i32_0 : i32, i32
  }
  func.func @transform_4(%arg0: i32, %arg1: i32) -> (i32, i32) {
    %c0_i32 = arith.constant 0 : i32
    %c0_i32_0 = arith.constant 0 : i32
    %c0_i32_1 = arith.constant 0 : i32
    return %c0_i32, %c0_i32_0 : i32, i32
  }
  func.func @transform_5(%arg0: i32, %arg1: i32) -> (i32, i32, i32, i32) {
    %c0_i32 = arith.constant 0 : i32
    %c0_i32_0 = arith.constant 0 : i32
    %c0_i32_1 = arith.constant 0 : i32
    return %arg0, %arg1, %c0_i32, %c0_i32_0 : i32, i32, i32, i32
  }
}

</mosaic_0001>

<llo_original>
// kernel: down_forward.1
$region0: #{down_forward.1}
  #allocation0 [shape = 'u32[]', space=smem, size = 0x4, offset = 0x4, fixed_abs, tag = 'smem constant byte address 0x4 - core index']
  #allocation1 [shape = 'u32[144,128]{1,0:T(1,128)}', space=vmem, size = 0x12000, scoped, tag = 'internal scratch']
  #allocation2 [shape = 'bf16[6,8,36]{2,1,0:T(8,128)(2,1)}', space=vmem, size = 0x3000, scoped, tag = 'scratch operand']
  #allocation3 [shape = 'bf16[6,10,8]{2,1,0:T(8,128)(2,1)}', space=vmem, size = 0x6000, scoped, tag = 'scratch operand']
  #allocation4 [shape = 'bf16[4,8,72]{2,1,0:T(8,128)(2,1)}', space=vmem, size = 0x2000, scoped, tag = 'scratch operand']
  %s0 = inlined_call_operand.vmem [shape: bf16[2,2,8,10,4], index: 0, kind: input, shape index: {}]
  %s1 = inlined_call_operand.vmem [shape: bf16[36,8], index: 1, kind: input, shape index: {}]
  %s2 = inlined_call_operand.vmem [shape: f32[1,8], index: 2, kind: input, shape index: {}]
  %s3 = inlined_call_operand.vmem [shape: bf16[72,8], index: 3, kind: input, shape index: {}]
  %s4 = inlined_call_operand.vmem [shape: f32[1,8], index: 4, kind: input, shape index: {}]
  %s5 = inlined_call_operand.vmem [shape: f32[2,8,8,8], index: 5, kind: output, shape index: {}]
  %s6 = sld [smem:[#allocation0]]
  $region61: #{down_forward.1} parent=0
    _
  %s8 = ssub.s32 1, %s6
  %s9 = scalar_select 0, %s8, %s6
  loop: start=0, step=1, limit=6
  $region2: #{down_forward.1} parent=0 // loop_pre_header
    _
  $region3: #{down_forward.1} parent=0 // loop_header
    %s11 = sphi 0, %s15
    %p12 = scmp.ge.s32.totalorder %s11, 6
    %s18 = sphi 0, %s30
    %s19 = sphi 0, %s26
    %s20 = sphi 0, %s18
    %s21 = sphi 0, %s19
    %s22 = sphi 0, %s20
    %s23 = sphi 0, %s21
    %s35 = sphi 0, %s37
    %s38 = sphi 0, %s35
    %s39 = sphi 0, %s38
    %s55 = sphi 0, %s39
    %s59 = sphi 0, %s59
    %s61 = sphi 0, %s59
    %s62 = sphi 0, %s61
    %s76 = sphi 0, %s62
    %s80 = sphi 0, %s80
    %s82 = sphi 0, %s80
    %s83 = sphi 0, %s82
    %s97 = sphi 0, %s83
    %s101 = sphi 0, %s101
    %s103 = sphi 0, %s101
    %s104 = sphi 0, %s103
    %s118 = sphi 0, %s104
    %s122 = sphi 0, %s122
    %s124 = sphi 0, %s122
    %s125 = sphi 0, %s124
    %s139 = sphi 0, %s125
    %s147 = sphi 0, %s149
    %s150 = sphi 0, %s147
    %s151 = sphi 0, %s150
    %s167 = sphi 0, %s151
  $region4: #{down_forward.1} parent=0 // loop_header_branch
    %14 = sbr.rel (%p12) target = $region8
  $region5: #{down_forward.1} parent=0 // loop_body
    %s16 = ssub.s32 %s11, 1
    %s17 = ssub.s32 %s11, 2
    %s24 = sadd.s32 1, %s19
    %p25 = scmp.ge.s32.totalorder %s24, 2
    %s26 = scalar_select %p25, 0, %s24
    %s27 = sadd.s32 1, %s18
    %s28 = scalar_select %p25, %s27, %s18
    %p29 = scmp.ge.s32.totalorder %s28, 2
    %s30 = scalar_select %p29, 0, %s28
    %s31 = ssub.s32 %s18, %s30
    %s32 = ssub.s32 %s19, %s26
    %s33 = sor.u32 %s31, %s32
    %p34 = scmp.eq.s32.totalorder %s33, 0
    %s36 = sadd.s32 %s35, 1
    %s37 = scalar_select %p34, %s35, %s36
    %p40 = pneg %p34
    %p41 = scmp.eq.s32.totalorder %s11, 3
    %p42 = por %p40, %p41
    %p43 = scmp.ne.s32.totalorder %s35, %s38
    %p44 = scmp.eq.s32.totalorder %s11, 0
    %p45 = por %p43, %p44
    %p46 = scmp.ne.s32.totalorder %s35, %s38
    %p47 = scmp.eq.s32.totalorder %s16, 3
    %p48 = por %p46, %p47
    %p49 = scmp.ne.s32.totalorder %s38, %s39
    %p50 = scmp.eq.s32.totalorder %s16, 0
    %p51 = por %p49, %p50
    %p52 = scmp.ne.s32.totalorder %s38, %s39
    %p53 = scmp.eq.s32.totalorder %s17, 3
    %p54 = por %p52, %p53
    %p56 = scmp.ne.s32.totalorder %s39, %s55
    %p57 = scmp.eq.s32.totalorder %s17, 0
    %p58 = por %p56, %p57
    %s60 = sadd.s32 %s59, 1
    %p63 = scmp.eq.s32.totalorder %s11, 3
    %p64 = scmp.ne.s32.totalorder %s59, %s61
    %p65 = scmp.eq.s32.totalorder %s11, 0
    %p66 = por %p64, %p65
    %p67 = scmp.ne.s32.totalorder %s59, %s61
    %p68 = scmp.eq.s32.totalorder %s16, 3
    %p69 = por %p67, %p68
    %p70 = scmp.ne.s32.totalorder %s61, %s62
    %p71 = scmp.eq.s32.totalorder %s16, 0
    %p72 = por %p70, %p71
    %p73 = scmp.ne.s32.totalorder %s61, %s62
    %p74 = scmp.eq.s32.totalorder %s17, 3
    %p75 = por %p73, %p74
    %p77 = scmp.ne.s32.totalorder %s62, %s76
    %p78 = scmp.eq.s32.totalorder %s17, 0
    %p79 = por %p77, %p78
    %s81 = sadd.s32 %s80, 1
    %p84 = scmp.eq.s32.totalorder %s11, 3
    %p85 = scmp.ne.s32.totalorder %s80, %s82
    %p86 = scmp.eq.s32.totalorder %s11, 0
    %p87 = por %p85, %p86
    %p88 = scmp.ne.s32.totalorder %s80, %s82
    %p89 = scmp.eq.s32.totalorder %s16, 3
    %p90 = por %p88, %p89
    %p91 = scmp.ne.s32.totalorder %s82, %s83
    %p92 = scmp.eq.s32.totalorder %s16, 0
    %p93 = por %p91, %p92
    %p94 = scmp.ne.s32.totalorder %s82, %s83
    %p95 = scmp.eq.s32.totalorder %s17, 3
    %p96 = por %p94, %p95
    %p98 = scmp.ne.s32.totalorder %s83, %s97
    %p99 = scmp.eq.s32.totalorder %s17, 0
    %p100 = por %p98, %p99
    %s102 = sadd.s32 %s101, 1
    %p105 = scmp.eq.s32.totalorder %s11, 3
    %p106 = scmp.ne.s32.totalorder %s101, %s103
    %p107 = scmp.eq.s32.totalorder %s11, 0
    %p108 = por %p106, %p107
    %p109 = scmp.ne.s32.totalorder %s101, %s103
    %p110 = scmp.eq.s32.totalorder %s16, 3
    %p111 = por %p109, %p110
    %p112 = scmp.ne.s32.totalorder %s103, %s104
    %p113 = scmp.eq.s32.totalorder %s16, 0
    %p114 = por %p112, %p113
    %p115 = scmp.ne.s32.totalorder %s103, %s104
    %p116 = scmp.eq.s32.totalorder %s17, 3
    %p117 = por %p115, %p116
    %p119 = scmp.ne.s32.totalorder %s104, %s118
    %p120 = scmp.eq.s32.totalorder %s17, 0
    %p121 = por %p119, %p120
    %s123 = sadd.s32 %s122, 1
    %p126 = scmp.eq.s32.totalorder %s11, 3
    %p127 = scmp.ne.s32.totalorder %s122, %s124
    %p128 = scmp.eq.s32.totalorder %s11, 0
    %p129 = por %p127, %p128
    %p130 = scmp.ne.s32.totalorder %s122, %s124
    %p131 = scmp.eq.s32.totalorder %s16, 3
    %p132 = por %p130, %p131
    %p133 = scmp.ne.s32.totalorder %s124, %s125
    %p134 = scmp.eq.s32.totalorder %s16, 0
    %p135 = por %p133, %p134
    %p136 = scmp.ne.s32.totalorder %s124, %s125
    %p137 = scmp.eq.s32.totalorder %s17, 3
    %p138 = por %p136, %p137
    %p140 = scmp.ne.s32.totalorder %s125, %s139
    %p141 = scmp.eq.s32.totalorder %s17, 0
    %p142 = por %p140, %p141
    %s143 = ssub.s32 %s18, %s30
    %s144 = ssub.s32 %s19, %s26
    %s145 = sor.u32 %s143, %s144
    %p146 = scmp.eq.s32.totalorder %s145, 0
    %s148 = sadd.s32 %s147, 1
    %s149 = scalar_select %p146, %s147, %s148
    %p152 = pneg %p146
    %p153 = scmp.eq.s32.totalorder %s11, 3
    %p154 = por %p152, %p153
    %p155 = scmp.ne.s32.totalorder %s147, %s150
    %p156 = scmp.eq.s32.totalorder %s11, 0
    %p157 = por %p155, %p156
    %p158 = scmp.ne.s32.totalorder %s147, %s150
    %p159 = scmp.eq.s32.totalorder %s16, 3
    %p160 = por %p158, %p159
    %p161 = scmp.ne.s32.totalorder %s150, %s151
    %p162 = scmp.eq.s32.totalorder %s16, 0
    %p163 = por %p161, %p162
    %p164 = scmp.ne.s32.totalorder %s150, %s151
    %p165 = scmp.eq.s32.totalorder %s17, 3
    %p166 = por %p164, %p165
    %p168 = scmp.ne.s32.totalorder %s151, %s167
    %p169 = scmp.eq.s32.totalorder %s17, 0
    %p170 = por %p168, %p169
    %p171 = scmp.le.s32.totalorder 1, %s11
    %p172 = scmp.lt.s32.totalorder %s11, 5
    %p173 = pnand %p171, %p172
    %p174 = pneg %p173
    // Predicated region
    $region9: #{down_forward.1} parent=5 // pred_check
      _
    $region10: #{down_forward.1} parent=5 // pred_check_branch
      %176 = sbr.rel (%p173) target = $region12
    $region11: #{down_forward.1} parent=5 // pred_region
      %s177 = ssub.s32 %s11, 1
      // Predicated region
      $region13: #{down_forward.1} parent=11 // pred_check
        %p178 = pneg %p72
      $region14: #{down_forward.1} parent=11 // pred_check_branch
        %180 = sbr.rel (%p178) target = $region16
      $region15: #{down_forward.1} parent=11 // pred_region
        _
      $region16: #{down_forward.1} parent=11 // pred_fallthru
        _
      // Predicated region
      $region17: #{down_forward.1} parent=11 // pred_check
        %p181 = pneg %p93
      $region18: #{down_forward.1} parent=11 // pred_check_branch
        %183 = sbr.rel (%p181) target = $region20
      $region19: #{down_forward.1} parent=11 // pred_region
        _
      $region20: #{down_forward.1} parent=11 // pred_fallthru
        _
      // Predicated region
      $region21: #{down_forward.1} parent=11 // pred_check
        %p184 = pneg %p114
      $region22: #{down_forward.1} parent=11 // pred_check_branch
        %186 = sbr.rel (%p184) target = $region24
      $region23: #{down_forward.1} parent=11 // pred_region
        _
      $region24: #{down_forward.1} parent=11 // pred_fallthru
        _
      // Predicated region
      $region25: #{down_forward.1} parent=11 // pred_check
        %p187 = pneg %p135
      $region26: #{down_forward.1} parent=11 // pred_check_branch
        %189 = sbr.rel (%p187) target = $region28
      $region27: #{down_forward.1} parent=11 // pred_region
        _
      $region28: #{down_forward.1} parent=11 // pred_fallthru
        _
    $region12: #{down_forward.1} parent=5 // pred_fallthru
      _
    %p190 = scmp.lt.s32.totalorder %s11, 4
    // Predicated region
    $region29: #{down_forward.1} parent=5 // pred_check
      %p191 = pneg %p190
    $region30: #{down_forward.1} parent=5 // pred_check_branch
      %193 = sbr.rel (%p191) target = $region32
    $region31: #{down_forward.1} parent=5 // pred_region
      // Predicated region
      $region33: #{down_forward.1} parent=31 // pred_check
        %p194 = pneg %p45
      $region34: #{down_forward.1} parent=31 // pred_check_branch
        %196 = sbr.rel (%p194) target = $region36
      $region35: #{down_forward.1} parent=31 // pred_region
        %p197 = scmp.lt.s32.totalorder %s18, 1
        %s198 = scalar_select %p197, %s18, 1
        %p199 = scmp.lt.s32.totalorder %s19, 1
        %s200 = scalar_select %p199, %s19, 1
        %s201 = smul.addr %s200, 16
        %s202 = smul.addr %s198, 32
        %s203 = sadd.s32 %s201, %s202
        %s204 = smul.addr %s203, 4
        %s205 = scalar_lea.vmem %s0, %s204
      $region36: #{down_forward.1} parent=31 // pred_fallthru
        _
    $region32: #{down_forward.1} parent=5 // pred_fallthru
      _
    %p206 = scmp.le.s32.totalorder 1, %s11
    %p207 = scmp.lt.s32.totalorder %s11, 5
    %p208 = pnand %p206, %p207
    %p209 = pneg %p208
    // Predicated region
    $region37: #{down_forward.1} parent=5 // pred_check
      _
    $region38: #{down_forward.1} parent=5 // pred_check_branch
      %211 = sbr.rel (%p208) target = $region40
    $region39: #{down_forward.1} parent=5 // pred_region
      %s212 = ssub.s32 %s11, 1
      %p213 = scmp.lt.s32.totalorder %s20, 1
      %s214 = scalar_select %p213, %s20, 1
      %p215 = scmp.lt.s32.totalorder %s21, 1
      %s216 = scalar_select %p215, %s21, 1
      %s217 = smul.addr %s216, 16
      %s218 = smul.addr %s214, 32
      %s219 = sadd.s32 %s217, %s218
      %s220 = smul.addr %s219, 4
      %s221 = scalar_lea.vmem %s0, %s220
      %p222 = pneg %p51
      %p223 = pneg %p48
      %p224 = pneg %p72
      %p225 = pneg %p69
      %p226 = pneg %p93
      %p227 = pneg %p90
      %p228 = pneg %p114
      %p229 = pneg %p111
      %p230 = pneg %p135
      %p231 = pneg %p132
      %p232 = pneg %p163
      %p233 = pneg %p160
      %s234 = smul.u32 4, %s21
      %p235 = scmp.lt.s32.totalorder %s20, 1
      %s236 = scalar_select %p235, %s20, 1
      %p237 = scmp.lt.s32.totalorder %s234, 7
      %s238 = scalar_select %p237, %s234, 7
      %s239 = smul.addr %s236, 8
      %s240 = sadd.s32 %s238, %s239
      %s241 = smul.addr %s240, 8
      %s242 = scalar_lea.vmem %s5, %s241
      %p243 = scmp.lt.s32.totalorder %s20, 1
      %s244 = scalar_select %p243, %s20, 1
      %p245 = scmp.lt.s32.totalorder %s21, 1
      %s246 = scalar_select %p245, %s21, 1
      %s247 = smul.addr %s246, 16
      %s248 = smul.addr %s244, 32
      %s249 = sadd.s32 %s247, %s248
      %s250 = smul.addr %s249, 4
      %s251 = scalar_lea.vmem %s0, %s250
      %s252 = smul.u32 4, %s21
      %p253 = scmp.lt.s32.totalorder %s20, 1
      %s254 = scalar_select %p253, %s20, 1
      %p255 = scmp.lt.s32.totalorder %s252, 7
      %s256 = scalar_select %p255, %s252, 7
      %s257 = smul.addr %s254, 8
      %s258 = sadd.s32 %s256, %s257
      %s259 = smul.addr %s258, 8
      %s260 = scalar_lea.vmem %s5, %s259
      %s261 = smul.u32 4, %s21
      %v263 = vld [vmem:[%s251] sm:$0xf]
      %v264 = vld [vmem:[%s251 + $0x8] sm:$0xf]
      %v265 = vld [vmem:[%s251 + $0x10] sm:$0xf]
      %v266 = vld [vmem:[%s251 + $0x18] sm:$0xf]
      %v267 = vld [vmem:[%s251 + $0x20] sm:$0xf]
      %v268 = vld [vmem:[%s251 + $0x28] sm:$0xf]
      %vm269 = vcmask 27648
      %270 = vst.msk [vmem:[#allocation2] sm:$0xf] %vm269, %v263
      %271 = vst.msk [vmem:[#allocation2 + $0x4] sm:$0xf] %vm269, %v264
      %272 = vst.msk [vmem:[#allocation2 + $0x8] sm:$0xf] %vm269, %v265
      %273 = vst.msk [vmem:[#allocation2 + $0xc] sm:$0xf] %vm269, %v266
      %274 = vst.msk [vmem:[#allocation2 + $0x10] sm:$0xf] %vm269, %v267
      %275 = vst.msk [vmem:[#allocation2 + $0x14] sm:$0xf] %vm269, %v268
      %v276 = vld [vmem:[%s251] sm:$0xf]
      %v277 = vld [vmem:[%s251 + $0x4] sm:$0x1]
      %v278 = vld [vmem:[%s251 + $0x8] sm:$0xf]
      %v279 = vld [vmem:[%s251 + $0xc] sm:$0x1]
      %v280 = vld [vmem:[%s251 + $0x10] sm:$0xf]
      %v281 = vld [vmem:[%s251 + $0x14] sm:$0x1]
      %v282 = vld [vmem:[%s251 + $0x18] sm:$0xf]
      %v283 = vld [vmem:[%s251 + $0x1c] sm:$0x1]
      %v284 = vld [vmem:[%s251 + $0x20] sm:$0xf]
      %v285 = vld [vmem:[%s251 + $0x24] sm:$0x1]
      %v286 = vld [vmem:[%s251 + $0x28] sm:$0xf]
      %v287 = vld [vmem:[%s251 + $0x2c] sm:$0x1]
      %vm288 = vsmask.f32 3328
      %vm289 = vsmask.f32 7440
      %vm290 = vmor %vm288, %vm289
      %v292 = vshrl.u32 %v276, 16
      %v294 = vrot.slane %v292, 4
      %v295 = vshll.u32 %v276, 16
      %v297 = vrot.slane %v295, 5
      %v298 = vor.u32 %v294, %v297
      %v299 = vrot.slane %v298, 4
      %v301 = vshll.u32 %v277, 16
      %v303 = vrot.slane %v301, 5
      %v304 = vsel %vm290, %v299, %v303
      %v306 = vshrl.u32 %v278, 16
      %v308 = vrot.slane %v306, 4
      %v309 = vshll.u32 %v278, 16
      %v311 = vrot.slane %v309, 5
      %v312 = vor.u32 %v308, %v311
      %v313 = vrot.slane %v312, 4
      %v315 = vshll.u32 %v279, 16
      %v317 = vrot.slane %v315, 5
      %v318 = vsel %vm290, %v313, %v317
      %v320 = vshrl.u32 %v280, 16
      %v322 = vrot.slane %v320, 4
      %v323 = vshll.u32 %v280, 16
      %v325 = vrot.slane %v323, 5
      %v326 = vor.u32 %v322, %v325
      %v327 = vrot.slane %v326, 4
      %v329 = vshll.u32 %v281, 16
      %v331 = vrot.slane %v329, 5
      %v332 = vsel %vm290, %v327, %v331
      %v334 = vshrl.u32 %v282, 16
      %v336 = vrot.slane %v334, 4
      %v337 = vshll.u32 %v282, 16
      %v339 = vrot.slane %v337, 5
      %v340 = vor.u32 %v336, %v339
      %v341 = vrot.slane %v340, 4
      %v343 = vshll.u32 %v283, 16
      %v345 = vrot.slane %v343, 5
      %v346 = vsel %vm290, %v341, %v345
      %v348 = vshrl.u32 %v284, 16
      %v350 = vrot.slane %v348, 4
      %v351 = vshll.u32 %v284, 16
      %v353 = vrot.slane %v351, 5
      %v354 = vor.u32 %v350, %v353
      %v355 = vrot.slane %v354, 4
      %v357 = vshll.u32 %v285, 16
      %v359 = vrot.slane %v357, 5
      %v360 = vsel %vm290, %v355, %v359
      %v362 = vshrl.u32 %v286, 16
      %v364 = vrot.slane %v362, 4
      %v365 = vshll.u32 %v286, 16
      %v367 = vrot.slane %v365, 5
      %v368 = vor.u32 %v364, %v367
      %v369 = vrot.slane %v368, 4
      %v371 = vshll.u32 %v287, 16
      %v373 = vrot.slane %v371, 5
      %v374 = vsel %vm290, %v369, %v373
      %375 = vrot.lane.b32.xlu0 %v304, 4
      %v376 = vpop.permute.xlu0 %375
      %377 = vrot.lane.b32.xlu0 %v318, 4
      %v378 = vpop.permute.xlu0 %377
      %379 = vrot.lane.b32.xlu0 %v332, 4
      %v380 = vpop.permute.xlu0 %379
      %381 = vrot.lane.b32.xlu0 %v346, 4
      %v382 = vpop.permute.xlu0 %381
      %383 = vrot.lane.b32.xlu0 %v360, 4
      %v384 = vpop.permute.xlu0 %383
      %385 = vrot.lane.b32.xlu0 %v374, 4
      %v386 = vpop.permute.xlu0 %385
      %vm393 = vcmask 60448
      %394 = vst.msk [vmem:[#allocation2] sm:$0xf] %vm393, %v376
      %395 = vst.msk [vmem:[#allocation2 + $0x4] sm:$0xf] %vm393, %v378
      %396 = vst.msk [vmem:[#allocation2 + $0x8] sm:$0xf] %vm393, %v380
      %397 = vst.msk [vmem:[#allocation2 + $0xc] sm:$0xf] %vm393, %v382
      %398 = vst.msk [vmem:[#allocation2 + $0x10] sm:$0xf] %vm393, %v384
      %399 = vst.msk [vmem:[#allocation2 + $0x14] sm:$0xf] %vm393, %v386
      %v400 = vld [vmem:[%s251] sm:$0xe]
      %v401 = vld [vmem:[%s251 + $0x4] sm:$0x1]
      %v402 = vld [vmem:[%s251 + $0x8] sm:$0xe]
      %v403 = vld [vmem:[%s251 + $0xc] sm:$0x1]
      %v404 = vld [vmem:[%s251 + $0x10] sm:$0xe]
      %v405 = vld [vmem:[%s251 + $0x14] sm:$0x1]
      %v406 = vld [vmem:[%s251 + $0x18] sm:$0xe]
      %v407 = vld [vmem:[%s251 + $0x1c] sm:$0x1]
      %v408 = vld [vmem:[%s251 + $0x20] sm:$0xe]
      %v409 = vld [vmem:[%s251 + $0x24] sm:$0x1]
      %v410 = vld [vmem:[%s251 + $0x28] sm:$0xe]
      %v411 = vld [vmem:[%s251 + $0x2c] sm:$0x1]
      %vm424 = vcmask 1042432
      %vm425 = vcmask 1046532
      %vm426 = vmor %vm424, %vm425
      %v427 = vrot.slane %v400, 5
      %v428 = vrot.slane %v427, 4
      %v429 = vrot.slane %v401, 5
      %v430 = vsel %vm426, %v428, %v429
      %v431 = vrot.slane %v402, 5
      %v432 = vrot.slane %v431, 4
      %v433 = vrot.slane %v403, 5
      %v434 = vsel %vm426, %v432, %v433
      %v435 = vrot.slane %v404, 5
      %v436 = vrot.slane %v435, 4
      %v437 = vrot.slane %v405, 5
      %v438 = vsel %vm426, %v436, %v437
      %v439 = vrot.slane %v406, 5
      %v440 = vrot.slane %v439, 4
      %v441 = vrot.slane %v407, 5
      %v442 = vsel %vm426, %v440, %v441
      %v443 = vrot.slane %v408, 5
      %v444 = vrot.slane %v443, 4
      %v445 = vrot.slane %v409, 5
      %v446 = vsel %vm426, %v444, %v445
      %v447 = vrot.slane %v410, 5
      %v448 = vrot.slane %v447, 4
      %v449 = vrot.slane %v411, 5
      %v450 = vsel %vm426, %v448, %v449
      %451 = vrot.lane.b32.xlu0 %v430, 8
      %v452 = vpop.permute.xlu0 %451
      %453 = vrot.lane.b32.xlu0 %v434, 8
      %v454 = vpop.permute.xlu0 %453
      %455 = vrot.lane.b32.xlu0 %v438, 8
      %v456 = vpop.permute.xlu0 %455
      %457 = vrot.lane.b32.xlu0 %v442, 8
      %v458 = vpop.permute.xlu0 %457
      %459 = vrot.lane.b32.xlu0 %v446, 8
      %v460 = vpop.permute.xlu0 %459
      %461 = vrot.lane.b32.xlu0 %v450, 8
      %v462 = vpop.permute.xlu0 %461
      %vm469 = vcmask 93248
      %470 = vst.msk [vmem:[#allocation2] sm:$0xf] %vm469, %v452
      %471 = vst.msk [vmem:[#allocation2 + $0x4] sm:$0xf] %vm469, %v454
      %472 = vst.msk [vmem:[#allocation2 + $0x8] sm:$0xf] %vm469, %v456
      %473 = vst.msk [vmem:[#allocation2 + $0xc] sm:$0xf] %vm469, %v458
      %474 = vst.msk [vmem:[#allocation2 + $0x10] sm:$0xf] %vm469, %v460
      %475 = vst.msk [vmem:[#allocation2 + $0x14] sm:$0xf] %vm469, %v462
      %s476 = scalar_lea.vmem %s251, 8
      %v477 = vld [vmem:[%s476] sm:$0xf]
      %v478 = vld [vmem:[%s476 + $0x8] sm:$0xf]
      %v479 = vld [vmem:[%s476 + $0x10] sm:$0xf]
      %v480 = vld [vmem:[%s476 + $0x18] sm:$0xf]
      %v481 = vld [vmem:[%s476 + $0x20] sm:$0xf]
      %v482 = vld [vmem:[%s476 + $0x28] sm:$0xf]
      %489 = vrot.lane.b32.xlu0 %v477, 12
      %v490 = vpop.permute.xlu0 %489
      %491 = vrot.lane.b32.xlu0 %v478, 12
      %v492 = vpop.permute.xlu0 %491
      %493 = vrot.lane.b32.xlu0 %v479, 12
      %v494 = vpop.permute.xlu0 %493
      %495 = vrot.lane.b32.xlu0 %v480, 12
      %v496 = vpop.permute.xlu0 %495
      %497 = vrot.lane.b32.xlu0 %v481, 12
      %v498 = vpop.permute.xlu0 %497
      %499 = vrot.lane.b32.xlu0 %v482, 12
      %v500 = vpop.permute.xlu0 %499
      %vm507 = vcmask 126048
      %508 = vst.msk [vmem:[#allocation2] sm:$0xf] %vm507, %v490
      %509 = vst.msk [vmem:[#allocation2 + $0x4] sm:$0xf] %vm507, %v492
      %510 = vst.msk [vmem:[#allocation2 + $0x8] sm:$0xf] %vm507, %v494
      %511 = vst.msk [vmem:[#allocation2 + $0xc] sm:$0xf] %vm507, %v496
      %512 = vst.msk [vmem:[#allocation2 + $0x10] sm:$0xf] %vm507, %v498
      %513 = vst.msk [vmem:[#allocation2 + $0x14] sm:$0xf] %vm507, %v500
      %v514 = vld [vmem:[%s476] sm:$0xf]
      %v515 = vld [vmem:[%s476 + $0x4] sm:$0x1]
      %v516 = vld [vmem:[%s476 + $0x8] sm:$0xf]
      %v517 = vld [vmem:[%s476 + $0xc] sm:$0x1]
      %v518 = vld [vmem:[%s476 + $0x10] sm:$0xf]
      %v519 = vld [vmem:[%s476 + $0x14] sm:$0x1]
      %v520 = vld [vmem:[%s476 + $0x18] sm:$0xf]
      %v521 = vld [vmem:[%s476 + $0x1c] sm:$0x1]
      %v522 = vld [vmem:[%s476 + $0x20] sm:$0xf]
      %v523 = vld [vmem:[%s476 + $0x24] sm:$0x1]
      %v524 = vld [vmem:[%s476 + $0x28] sm:$0xf]
      %v525 = vld [vmem:[%s476 + $0x2c] sm:$0x1]
      %v527 = vshrl.u32 %v514, 16
      %v529 = vrot.slane %v527, 4
      %v530 = vshll.u32 %v514, 16
      %v532 = vrot.slane %v530, 5
      %v533 = vor.u32 %v529, %v532
      %v534 = vrot.slane %v533, 4
      %v536 = vshll.u32 %v515, 16
      %v538 = vrot.slane %v536, 5
      %v539 = vsel %vm290, %v534, %v538
      %v541 = vshrl.u32 %v516, 16
      %v543 = vrot.slane %v541, 4
      %v544 = vshll.u32 %v516, 16
      %v546 = vrot.slane %v544, 5
      %v547 = vor.u32 %v543, %v546
      %v548 = vrot.slane %v547, 4
      %v550 = vshll.u32 %v517, 16
      %v552 = vrot.slane %v550, 5
      %v553 = vsel %vm290, %v548, %v552
      %v555 = vshrl.u32 %v518, 16
      %v557 = vrot.slane %v555, 4
      %v558 = vshll.u32 %v518, 16
      %v560 = vrot.slane %v558, 5
      %v561 = vor.u32 %v557, %v560
      %v562 = vrot.slane %v561, 4
      %v564 = vshll.u32 %v519, 16
      %v566 = vrot.slane %v564, 5
      %v567 = vsel %vm290, %v562, %v566
      %v569 = vshrl.u32 %v520, 16
      %v571 = vrot.slane %v569, 4
      %v572 = vshll.u32 %v520, 16
      %v574 = vrot.slane %v572, 5
      %v575 = vor.u32 %v571, %v574
      %v576 = vrot.slane %v575, 4
      %v578 = vshll.u32 %v521, 16
      %v580 = vrot.slane %v578, 5
      %v581 = vsel %vm290, %v576, %v580
      %v583 = vshrl.u32 %v522, 16
      %v585 = vrot.slane %v583, 4
      %v586 = vshll.u32 %v522, 16
      %v588 = vrot.slane %v586, 5
      %v589 = vor.u32 %v585, %v588
      %v590 = vrot.slane %v589, 4
      %v592 = vshll.u32 %v523, 16
      %v594 = vrot.slane %v592, 5
      %v595 = vsel %vm290, %v590, %v594
      %v597 = vshrl.u32 %v524, 16
      %v599 = vrot.slane %v597, 4
      %v600 = vshll.u32 %v524, 16
      %v602 = vrot.slane %v600, 5
      %v603 = vor.u32 %v599, %v602
      %v604 = vrot.slane %v603, 4
      %v606 = vshll.u32 %v525, 16
      %v608 = vrot.slane %v606, 5
      %v609 = vsel %vm290, %v604, %v608
      %610 = vrot.lane.b32.xlu0 %v539, 16
      %v611 = vpop.permute.xlu0 %610
      %612 = vrot.lane.b32.xlu0 %v553, 16
      %v613 = vpop.permute.xlu0 %612
      %614 = vrot.lane.b32.xlu0 %v567, 16
      %v615 = vpop.permute.xlu0 %614
      %616 = vrot.lane.b32.xlu0 %v581, 16
      %v617 = vpop.permute.xlu0 %616
      %618 = vrot.lane.b32.xlu0 %v595, 16
      %v619 = vpop.permute.xlu0 %618
      %620 = vrot.lane.b32.xlu0 %v609, 16
      %v621 = vpop.permute.xlu0 %620
      %vm628 = vcmask 158848
      %629 = vst.msk [vmem:[#allocation2] sm:$0xf] %vm628, %v611
      %630 = vst.msk [vmem:[#allocation2 + $0x4] sm:$0xf] %vm628, %v613
      %631 = vst.msk [vmem:[#allocation2 + $0x8] sm:$0xf] %vm628, %v615
      %632 = vst.msk [vmem:[#allocation2 + $0xc] sm:$0xf] %vm628, %v617
      %633 = vst.msk [vmem:[#allocation2 + $0x10] sm:$0xf] %vm628, %v619
      %634 = vst.msk [vmem:[#allocation2 + $0x14] sm:$0xf] %vm628, %v621
      %v635 = vld [vmem:[%s476] sm:$0xe]
      %v636 = vld [vmem:[%s476 + $0x4] sm:$0x1]
      %v637 = vld [vmem:[%s476 + $0x8] sm:$0xe]
      %v638 = vld [vmem:[%s476 + $0xc] sm:$0x1]
      %v639 = vld [vmem:[%s476 + $0x10] sm:$0xe]
      %v640 = vld [vmem:[%s476 + $0x14] sm:$0x1]
      %v641 = vld [vmem:[%s476 + $0x18] sm:$0xe]
      %v642 = vld [vmem:[%s476 + $0x1c] sm:$0x1]
      %v643 = vld [vmem:[%s476 + $0x20] sm:$0xe]
      %v644 = vld [vmem:[%s476 + $0x24] sm:$0x1]
      %v645 = vld [vmem:[%s476 + $0x28] sm:$0xe]
      %v646 = vld [vmem:[%s476 + $0x2c] sm:$0x1]
      %v659 = vrot.slane %v635, 5
      %v660 = vrot.slane %v659, 4
      %v661 = vrot.slane %v636, 5
      %v662 = vsel %vm426, %v660, %v661
      %v663 = vrot.slane %v637, 5
      %v664 = vrot.slane %v663, 4
      %v665 = vrot.slane %v638, 5
      %v666 = vsel %vm426, %v664, %v665
      %v667 = vrot.slane %v639, 5
      %v668 = vrot.slane %v667, 4
      %v669 = vrot.slane %v640, 5
      %v670 = vsel %vm426, %v668, %v669
      %v671 = vrot.slane %v641, 5
      %v672 = vrot.slane %v671, 4
      %v673 = vrot.slane %v642, 5
      %v674 = vsel %vm426, %v672, %v673
      %v675 = vrot.slane %v643, 5
      %v676 = vrot.slane %v675, 4
      %v677 = vrot.slane %v644, 5
      %v678 = vsel %vm426, %v676, %v677
      %v679 = vrot.slane %v645, 5
      %v680 = vrot.slane %v679, 4
      %v681 = vrot.slane %v646, 5
      %v682 = vsel %vm426, %v680, %v681
      %683 = vrot.lane.b32.xlu0 %v662, 20
      %v684 = vpop.permute.xlu0 %683
      %685 = vrot.lane.b32.xlu0 %v666, 20
      %v686 = vpop.permute.xlu0 %685
      %687 = vrot.lane.b32.xlu0 %v670, 20
      %v688 = vpop.permute.xlu0 %687
      %689 = vrot.lane.b32.xlu0 %v674, 20
      %v690 = vpop.permute.xlu0 %689
      %691 = vrot.lane.b32.xlu0 %v678, 20
      %v692 = vpop.permute.xlu0 %691
      %693 = vrot.lane.b32.xlu0 %v682, 20
      %v694 = vpop.permute.xlu0 %693
      %vm701 = vcmask 191648
      %702 = vst.msk [vmem:[#allocation2] sm:$0xf] %vm701, %v684
      %703 = vst.msk [vmem:[#allocation2 + $0x4] sm:$0xf] %vm701, %v686
      %704 = vst.msk [vmem:[#allocation2 + $0x8] sm:$0xf] %vm701, %v688
      %705 = vst.msk [vmem:[#allocation2 + $0xc] sm:$0xf] %vm701, %v690
      %706 = vst.msk [vmem:[#allocation2 + $0x10] sm:$0xf] %vm701, %v692
      %707 = vst.msk [vmem:[#allocation2 + $0x14] sm:$0xf] %vm701, %v694
      %s708 = scalar_lea.vmem %s251, 16
      %v709 = vld [vmem:[%s708] sm:$0xf]
      %v710 = vld [vmem:[%s708 + $0x8] sm:$0xf]
      %v711 = vld [vmem:[%s708 + $0x10] sm:$0xf]
      %v712 = vld [vmem:[%s708 + $0x18] sm:$0xf]
      %v713 = vld [vmem:[%s708 + $0x20] sm:$0xf]
      %v714 = vld [vmem:[%s708 + $0x28] sm:$0xf]
      %721 = vrot.lane.b32.xlu0 %v709, 24
      %v722 = vpop.permute.xlu0 %721
      %723 = vrot.lane.b32.xlu0 %v710, 24
      %v724 = vpop.permute.xlu0 %723
      %725 = vrot.lane.b32.xlu0 %v711, 24
      %v726 = vpop.permute.xlu0 %725
      %727 = vrot.lane.b32.xlu0 %v712, 24
      %v728 = vpop.permute.xlu0 %727
      %729 = vrot.lane.b32.xlu0 %v713, 24
      %v730 = vpop.permute.xlu0 %729
      %731 = vrot.lane.b32.xlu0 %v714, 24
      %v732 = vpop.permute.xlu0 %731
      %vm739 = vcmask 224448
      %740 = vst.msk [vmem:[#allocation2] sm:$0xf] %vm739, %v722
      %741 = vst.msk [vmem:[#allocation2 + $0x4] sm:$0xf] %vm739, %v724
      %742 = vst.msk [vmem:[#allocation2 + $0x8] sm:$0xf] %vm739, %v726
      %743 = vst.msk [vmem:[#allocation2 + $0xc] sm:$0xf] %vm739, %v728
      %744 = vst.msk [vmem:[#allocation2 + $0x10] sm:$0xf] %vm739, %v730
      %745 = vst.msk [vmem:[#allocation2 + $0x14] sm:$0xf] %vm739, %v732
      %v746 = vld [vmem:[%s708] sm:$0xf]
      %v747 = vld [vmem:[%s708 + $0x4] sm:$0x1]
      %v748 = vld [vmem:[%s708 + $0x8] sm:$0xf]
      %v749 = vld [vmem:[%s708 + $0xc] sm:$0x1]
      %v750 = vld [vmem:[%s708 + $0x10] sm:$0xf]
      %v751 = vld [vmem:[%s708 + $0x14] sm:$0x1]
      %v752 = vld [vmem:[%s708 + $0x18] sm:$0xf]
      %v753 = vld [vmem:[%s708 + $0x1c] sm:$0x1]
      %v754 = vld [vmem:[%s708 + $0x20] sm:$0xf]
      %v755 = vld [vmem:[%s708 + $0x24] sm:$0x1]
      %v756 = vld [vmem:[%s708 + $0x28] sm:$0xf]
      %v757 = vld [vmem:[%s708 + $0x2c] sm:$0x1]
      %v759 = vshrl.u32 %v746, 16
      %v761 = vrot.slane %v759, 4
      %v762 = vshll.u32 %v746, 16
      %v764 = vrot.slane %v762, 5
      %v765 = vor.u32 %v761, %v764
      %v766 = vrot.slane %v765, 4
      %v768 = vshll.u32 %v747, 16
      %v770 = vrot.slane %v768, 5
      %v771 = vsel %vm290, %v766, %v770
      %v773 = vshrl.u32 %v748, 16
      %v775 = vrot.slane %v773, 4
      %v776 = vshll.u32 %v748, 16
      %v778 = vrot.slane %v776, 5
      %v779 = vor.u32 %v775, %v778
      %v780 = vrot.slane %v779, 4
      %v782 = vshll.u32 %v749, 16
      %v784 = vrot.slane %v782, 5
      %v785 = vsel %vm290, %v780, %v784
      %v787 = vshrl.u32 %v750, 16
      %v789 = vrot.slane %v787, 4
      %v790 = vshll.u32 %v750, 16
      %v792 = vrot.slane %v790, 5
      %v793 = vor.u32 %v789, %v792
      %v794 = vrot.slane %v793, 4
      %v796 = vshll.u32 %v751, 16
      %v798 = vrot.slane %v796, 5
      %v799 = vsel %vm290, %v794, %v798
      %v801 = vshrl.u32 %v752, 16
      %v803 = vrot.slane %v801, 4
      %v804 = vshll.u32 %v752, 16
      %v806 = vrot.slane %v804, 5
      %v807 = vor.u32 %v803, %v806
      %v808 = vrot.slane %v807, 4
      %v810 = vshll.u32 %v753, 16
      %v812 = vrot.slane %v810, 5
      %v813 = vsel %vm290, %v808, %v812
      %v815 = vshrl.u32 %v754, 16
      %v817 = vrot.slane %v815, 4
      %v818 = vshll.u32 %v754, 16
      %v820 = vrot.slane %v818, 5
      %v821 = vor.u32 %v817, %v820
      %v822 = vrot.slane %v821, 4
      %v824 = vshll.u32 %v755, 16
      %v826 = vrot.slane %v824, 5
      %v827 = vsel %vm290, %v822, %v826
      %v829 = vshrl.u32 %v756, 16
      %v831 = vrot.slane %v829, 4
      %v832 = vshll.u32 %v756, 16
      %v834 = vrot.slane %v832, 5
      %v835 = vor.u32 %v831, %v834
      %v836 = vrot.slane %v835, 4
      %v838 = vshll.u32 %v757, 16
      %v840 = vrot.slane %v838, 5
      %v841 = vsel %vm290, %v836, %v840
      %842 = vrot.lane.b32.xlu0 %v771, 28
      %v843 = vpop.permute.xlu0 %842
      %844 = vrot.lane.b32.xlu0 %v785, 28
      %v845 = vpop.permute.xlu0 %844
      %846 = vrot.lane.b32.xlu0 %v799, 28
      %v847 = vpop.permute.xlu0 %846
      %848 = vrot.lane.b32.xlu0 %v813, 28
      %v849 = vpop.permute.xlu0 %848
      %850 = vrot.lane.b32.xlu0 %v827, 28
      %v851 = vpop.permute.xlu0 %850
      %852 = vrot.lane.b32.xlu0 %v841, 28
      %v853 = vpop.permute.xlu0 %852
      %vm860 = vcmask 257248
      %861 = vst.msk [vmem:[#allocation2] sm:$0xf] %vm860, %v843
      %862 = vst.msk [vmem:[#allocation2 + $0x4] sm:$0xf] %vm860, %v845
      %863 = vst.msk [vmem:[#allocation2 + $0x8] sm:$0xf] %vm860, %v847
      %864 = vst.msk [vmem:[#allocation2 + $0xc] sm:$0xf] %vm860, %v849
      %865 = vst.msk [vmem:[#allocation2 + $0x10] sm:$0xf] %vm860, %v851
      %866 = vst.msk [vmem:[#allocation2 + $0x14] sm:$0xf] %vm860, %v853
      %v867 = vld [vmem:[%s708] sm:$0xe]
      %v868 = vld [vmem:[%s708 + $0x4] sm:$0x1]
      %v869 = vld [vmem:[%s708 + $0x8] sm:$0xe]
      %v870 = vld [vmem:[%s708 + $0xc] sm:$0x1]
      %v871 = vld [vmem:[%s708 + $0x10] sm:$0xe]
      %v872 = vld [vmem:[%s708 + $0x14] sm:$0x1]
      %v873 = vld [vmem:[%s708 + $0x18] sm:$0xe]
      %v874 = vld [vmem:[%s708 + $0x1c] sm:$0x1]
      %v875 = vld [vmem:[%s708 + $0x20] sm:$0xe]
      %v876 = vld [vmem:[%s708 + $0x24] sm:$0x1]
      %v877 = vld [vmem:[%s708 + $0x28] sm:$0xe]
      %v878 = vld [vmem:[%s708 + $0x2c] sm:$0x1]
      %v891 = vrot.slane %v867, 5
      %v892 = vrot.slane %v891, 4
      %v893 = vrot.slane %v868, 5
      %v894 = vsel %vm426, %v892, %v893
      %v895 = vrot.slane %v869, 5
      %v896 = vrot.slane %v895, 4
      %v897 = vrot.slane %v870, 5
      %v898 = vsel %vm426, %v896, %v897
      %v899 = vrot.slane %v871, 5
      %v900 = vrot.slane %v899, 4
      %v901 = vrot.slane %v872, 5
      %v902 = vsel %vm426, %v900, %v901
      %v903 = vrot.slane %v873, 5
      %v904 = vrot.slane %v903, 4
      %v905 = vrot.slane %v874, 5
      %v906 = vsel %vm426, %v904, %v905
      %v907 = vrot.slane %v875, 5
      %v908 = vrot.slane %v907, 4
      %v909 = vrot.slane %v876, 5
      %v910 = vsel %vm426, %v908, %v909
      %v911 = vrot.slane %v877, 5
      %v912 = vrot.slane %v911, 4
      %v913 = vrot.slane %v878, 5
      %v914 = vsel %vm426, %v912, %v913
      %915 = vrot.lane.b32.xlu0 %v894, 32
      %v916 = vpop.permute.xlu0 %915
      %917 = vrot.lane.b32.xlu0 %v898, 32
      %v918 = vpop.permute.xlu0 %917
      %919 = vrot.lane.b32.xlu0 %v902, 32
      %v920 = vpop.permute.xlu0 %919
      %921 = vrot.lane.b32.xlu0 %v906, 32
      %v922 = vpop.permute.xlu0 %921
      %923 = vrot.lane.b32.xlu0 %v910, 32
      %v924 = vpop.permute.xlu0 %923
      %925 = vrot.lane.b32.xlu0 %v914, 32
      %v926 = vpop.permute.xlu0 %925
      %vm933 = vcmask 290048
      %934 = vst.msk [vmem:[#allocation2] sm:$0xf] %vm933, %v916
      %935 = vst.msk [vmem:[#allocation2 + $0x4] sm:$0xf] %vm933, %v918
      %936 = vst.msk [vmem:[#allocation2 + $0x8] sm:$0xf] %vm933, %v920
      %937 = vst.msk [vmem:[#allocation2 + $0xc] sm:$0xf] %vm933, %v922
      %938 = vst.msk [vmem:[#allocation2 + $0x10] sm:$0xf] %vm933, %v924
      %939 = vst.msk [vmem:[#allocation2 + $0x14] sm:$0xf] %vm933, %v926
      %v940 = vld [vmem:[#allocation2] sm:$0xf]
      %v941 = vld [vmem:[#allocation2 + $0x4] sm:$0xf]
      %v942 = vld [vmem:[#allocation2 + $0x8] sm:$0xf]
      %v943 = vld [vmem:[#allocation2 + $0xc] sm:$0xf]
      %v944 = vld [vmem:[#allocation2 + $0x10] sm:$0xf]
      %v945 = vld [vmem:[#allocation2 + $0x14] sm:$0xf]
      %v946 = vld [vmem:[%s1] sm:$0xf]
      %v947 = vld [vmem:[%s1 + $0x4] sm:$0xf]
      %v948 = vld [vmem:[%s1 + $0x8] sm:$0xf]
      %v949 = vld [vmem:[%s1 + $0xc] sm:$0xf]
      %v950 = vld [vmem:[%s1 + $0x10] sm:$0x3]
      %v951 = vld [vmem:[%s2] sm:$0x1]
      %v953 = vlaneseq
      %v954 = vshrl.u32 %v953, 7
      %v955 = vsub.s32 0, %v954
      %v956 = vrot.slane %v951, %v955
      %v964 = vunpack.c.l.b16 %v940
      %v965 = vunpack.c.l.b16 %v941
      %v966 = vunpack.c.l.b16 %v942
      %v967 = vunpack.c.l.b16 %v943
      %v968 = vunpack.c.l.b16 %v944
      %v969 = vunpack.c.l.b16 %v945
      %v970 = vpack.c.b16 %v965, %v964
      %v971 = vpack.c.b16 %v967, %v966
      %v972 = vpack.c.b16 %v969, %v968
      %v978 = vunpack.c.l.b16 %v946
      %v979 = vunpack.c.l.b16 %v947
      %v980 = vunpack.c.l.b16 %v948
      %v981 = vunpack.c.l.b16 %v949
      %v982 = vunpack.c.l.b16 %v950
      %v983 = vpack.c.b16 %v979, %v978
      %v984 = vpack.c.b16 %v981, %v980
      %v985 = vpack.c.b16 %v982, %v982
      %vm988 = vcmask 293888
      %v990 = vsel %vm988, %v970, 0
      %v993 = vsel %vm988, %v971, 0
      %v996 = vsel %vm988, %v972, 0
      %vm998 = vcmask 1041408
      %v1000 = vsel %vm998, %v985, 0
      %1002 = vmatprep.subr.bf16.mxu0 0
      %1003 = vmatpush1.bf16.msra.mxu0 %v983
      %1004 = vmatprep.subr.bf16.mxu0 0
      %1005 = vmatpush1.bf16.msra.mxu0 %v984
      %1006 = vmatprep.subr.bf16.mxu0 0
      %1007 = vmatpush1.bf16.msra.mxu0 %v1000
      %1008 = vmatprep.subr.bf16.mxu0 0
      %1009 = vmatpush1.bf16.msra.mxu0 0
      %1010 = vmatprep.subr.bf16.mxu0 0
      %1011 = vmatpush1.bf16.msra.mxu0 0
      %1012 = vmatprep.subr.bf16.mxu0 0
      %1013 = vmatpush1.bf16.msra.mxu0 0
      %1014 = vmatprep.subr.bf16.mxu0 0
      %1015 = vmatpush1.bf16.msra.mxu0 0
      %1016 = vmatprep.subr.bf16.mxu0 0
      %1017 = vmatpush1.bf16.msra.mxu0 0
      %1018 = vmatprep.subr.bf16.mxu0 0
      %1019 = vmatpush1.bf16.msra.mxu0 0
      %1020 = vmatprep.subr.bf16.mxu0 0
      %1021 = vmatpush1.bf16.msra.mxu0 0
      %1022 = vmatprep.subr.bf16.mxu0 0
      %1023 = vmatpush1.bf16.msra.mxu0 0
      %1024 = vmatprep.subr.bf16.mxu0 0
      %1025 = vmatpush1.bf16.msra.mxu0 0
      %1026 = vmatprep.subr.bf16.mxu0 0
      %1027 = vmatpush1.bf16.msra.mxu0 0
      %1028 = vmatprep.subr.bf16.mxu0 0
      %1029 = vmatpush1.bf16.msra.mxu0 0
      %1030 = vmatprep.subr.bf16.mxu0 0
      %1031 = vmatpush1.bf16.msra.mxu0 0
      %1032 = vmatprep.subr.bf16.mxu0 0
      %1033 = vmatpush1.bf16.msra.mxu0 0
      %1034 = vmatprep.mubr.bf16.mxu0 0
      %1035 = vmatmul.mubr.bf16.gmra.mrb[0].mxu0 %v990
      %v1036 = vpop.f32.mrb[0].mxu0
      %v1037 = vadd.f32 %v956, %v1036
      %v1038 = vpop.f32.mrb[0].mxu0
      %v1039 = vpop.f32.mrb[0].mxu0
      %v1040 = vadd.f32 %v956, %v1039
      %v1041 = vpop.f32.mrb[0].mxu0
      %1042 = vmatprep.mubr.bf16.mxu0 0
      %1043 = vmatmul.mubr.bf16.gmra.mrb[0].mxu0 %v993
      %v1044 = vpop.f32.mrb[0].mxu0
      %v1045 = vadd.f32 %v956, %v1044
      %v1046 = vpop.f32.mrb[0].mxu0
      %v1047 = vpop.f32.mrb[0].mxu0
      %v1048 = vadd.f32 %v956, %v1047
      %v1049 = vpop.f32.mrb[0].mxu0
      %1050 = vmatprep.mubr.bf16.mxu0 0
      %1051 = vmatmul.mubr.bf16.gmra.mrb[0].mxu0 %v996
      %v1052 = vpop.f32.mrb[0].mxu0
      %v1053 = vadd.f32 %v956, %v1052
      %v1054 = vpop.f32.mrb[0].mxu0
      %v1055 = vpop.f32.mrb[0].mxu0
      %v1056 = vadd.f32 %v956, %v1055
      %v1057 = vpop.f32.mrb[0].mxu0
      %1058 = vdwg.mxu0
      %v1059 = vmax.f32 %v1037, 0.0
      %v1060 = vmax.f32 %v1040, 0.0
      %v1061 = vmax.f32 %v1045, 0.0
      %v1062 = vmax.f32 %v1048, 0.0
      %v1063 = vmax.f32 %v1053, 0.0
      %v1064 = vmax.f32 %v1056, 0.0
      %v1065 = vpack.c.bf16 %v1059, %v1059
      %v1066 = vpack.c.bf16 %v1060, %v1060
      %v1067 = vpack.c.bf16 %v1061, %v1061
      %v1068 = vpack.c.bf16 %v1062, %v1062
      %v1069 = vpack.c.bf16 %v1063, %v1063
      %v1070 = vpack.c.bf16 %v1064, %v1064
      %v1077 = vunpack.c.l.b16 %v1065
      %v1078 = vunpack.c.l.b16 %v1066
      %v1079 = vunpack.c.l.b16 %v1067
      %v1080 = vunpack.c.l.b16 %v1068
      %v1081 = vunpack.c.l.b16 %v1069
      %v1082 = vunpack.c.l.b16 %v1070
      %v1083 = vpack.c.b16 %v1077, %v1077
      %v1084 = vpack.c.b16 %v1078, %v1078
      %v1085 = vpack.c.b16 %v1079, %v1079
      %v1086 = vpack.c.b16 %v1080, %v1080
      %v1087 = vpack.c.b16 %v1081, %v1081
      %v1088 = vpack.c.b16 %v1082, %v1082
      %v1090 = vshrl.u32 %v1083, 16
      %v1092 = vrot.slane %v1090, 7
      %v1093 = vshll.u32 %v1083, 16
      %v1095 = vor.u32 %v1092, %v1093
      %v1096 = vrot.slane %v1092, 4
      %v1098 = vshrl.u32 %v1084, 16
      %v1100 = vrot.slane %v1098, 7
      %v1101 = vshll.u32 %v1084, 16
      %v1103 = vor.u32 %v1100, %v1101
      %v1104 = vrot.slane %v1100, 4
      %v1106 = vshrl.u32 %v1085, 16
      %v1108 = vrot.slane %v1106, 7
      %v1109 = vshll.u32 %v1085, 16
      %v1111 = vor.u32 %v1108, %v1109
      %v1112 = vrot.slane %v1108, 4
      %v1114 = vshrl.u32 %v1086, 16
      %v1116 = vrot.slane %v1114, 7
      %v1117 = vshll.u32 %v1086, 16
      %v1119 = vor.u32 %v1116, %v1117
      %v1120 = vrot.slane %v1116, 4
      %v1122 = vshrl.u32 %v1087, 16
      %v1124 = vrot.slane %v1122, 7
      %v1125 = vshll.u32 %v1087, 16
      %v1127 = vor.u32 %v1124, %v1125
      %v1128 = vrot.slane %v1124, 4
      %v1130 = vshrl.u32 %v1088, 16
      %v1132 = vrot.slane %v1130, 7
      %v1133 = vshll.u32 %v1088, 16
      %v1135 = vor.u32 %v1132, %v1133
      %v1136 = vrot.slane %v1132, 4
      %vm1149 = vcmask 60416
      %vm1150 = vsmask.f32 7938
      %vm1151 = vmand %vm1149, %vm1150
      %v1152 = vld [vmem:[#allocation3] sm:$0xf]
      %v1153 = vsel %vm1151, %v1095, %v1152
      %1154 = vst [vmem:[#allocation3] sm:$0xf] %v1153
      %vm1155 = vcmask 57344
      %vm1156 = vsmask.f32 256
      %vm1157 = vmand %vm1155, %vm1156
      %v1158 = vld [vmem:[#allocation3 + $0x4] sm:$0x1]
      %v1159 = vsel %vm1157, %v1096, %v1158
      %1160 = vst [vmem:[#allocation3 + $0x4] sm:$0x1] %v1159
      %v1161 = vld [vmem:[#allocation3 + $0x8] sm:$0xf]
      %v1162 = vsel %vm1151, %v1103, %v1161
      %1163 = vst [vmem:[#allocation3 + $0x8] sm:$0xf] %v1162
      %v1164 = vld [vmem:[#allocation3 + $0xc] sm:$0x1]
      %v1165 = vsel %vm1157, %v1104, %v1164
      %1166 = vst [vmem:[#allocation3 + $0xc] sm:$0x1] %v1165
      %v1167 = vld [vmem:[#allocation3 + $0x10] sm:$0xf]
      %v1168 = vsel %vm1151, %v1111, %v1167
      %1169 = vst [vmem:[#allocation3 + $0x10] sm:$0xf] %v1168
      %v1170 = vld [vmem:[#allocation3 + $0x14] sm:$0x1]
      %v1171 = vsel %vm1157, %v1112, %v1170
      %1172 = vst [vmem:[#allocation3 + $0x14] sm:$0x1] %v1171
      %v1173 = vld [vmem:[#allocation3 + $0x18] sm:$0xf]
      %v1174 = vsel %vm1151, %v1119, %v1173
      %1175 = vst [vmem:[#allocation3 + $0x18] sm:$0xf] %v1174
      %v1176 = vld [vmem:[#allocation3 + $0x1c] sm:$0x1]
      %v1177 = vsel %vm1157, %v1120, %v1176
      %1178 = vst [vmem:[#allocation3 + $0x1c] sm:$0x1] %v1177
      %v1179 = vld [vmem:[#allocation3 + $0x20] sm:$0xf]
      %v1180 = vsel %vm1151, %v1127, %v1179
      %1181 = vst [vmem:[#allocation3 + $0x20] sm:$0xf] %v1180
      %v1182 = vld [vmem:[#allocation3 + $0x24] sm:$0x1]
      %v1183 = vsel %vm1157, %v1128, %v1182
      %1184 = vst [vmem:[#allocation3 + $0x24] sm:$0x1] %v1183
      %v1185 = vld [vmem:[#allocation3 + $0x28] sm:$0xf]
      %v1186 = vsel %vm1151, %v1135, %v1185
      %1187 = vst [vmem:[#allocation3 + $0x28] sm:$0xf] %v1186
      %v1188 = vld [vmem:[#allocation3 + $0x2c] sm:$0x1]
      %v1189 = vsel %vm1157, %v1136, %v1188
      %1190 = vst [vmem:[#allocation3 + $0x2c] sm:$0x1] %v1189
      %v1191 = vld [vmem:[#allocation3] sm:$0x1]
      %v1192 = vsel %vm1157, 0, %v1191
      %1193 = vst [vmem:[#allocation3] sm:$0x1] %v1192
      %v1194 = vld [vmem:[#allocation3 + $0x8] sm:$0x1]
      %v1195 = vsel %vm1157, 0, %v1194
      %1196 = vst [vmem:[#allocation3 + $0x8] sm:$0x1] %v1195
      %v1197 = vld [vmem:[#allocation3 + $0x10] sm:$0x1]
      %v1198 = vsel %vm1157, 0, %v1197
      %1199 = vst [vmem:[#allocation3 + $0x10] sm:$0x1] %v1198
      %v1200 = vld [vmem:[#allocation3 + $0x18] sm:$0x1]
      %v1201 = vsel %vm1157, 0, %v1200
      %1202 = vst [vmem:[#allocation3 + $0x18] sm:$0x1] %v1201
      %v1203 = vld [vmem:[#allocation3 + $0x20] sm:$0x1]
      %v1204 = vsel %vm1157, 0, %v1203
      %1205 = vst [vmem:[#allocation3 + $0x20] sm:$0x1] %v1204
      %v1206 = vld [vmem:[#allocation3 + $0x28] sm:$0x1]
      %v1207 = vsel %vm1157, 0, %v1206
      %1208 = vst [vmem:[#allocation3 + $0x28] sm:$0x1] %v1207
      %vm1209 = vmand %vm1155, %vm1150
      %v1210 = vld [vmem:[#allocation3 + $0x4] sm:$0x1]
      %v1211 = vsel %vm1209, 0, %v1210
      %1212 = vst [vmem:[#allocation3 + $0x4] sm:$0x1] %v1211
      %v1213 = vld [vmem:[#allocation3 + $0xc] sm:$0x1]
      %v1214 = vsel %vm1209, 0, %v1213
      %1215 = vst [vmem:[#allocation3 + $0xc] sm:$0x1] %v1214
      %v1216 = vld [vmem:[#allocation3 + $0x14] sm:$0x1]
      %v1217 = vsel %vm1209, 0, %v1216
      %1218 = vst [vmem:[#allocation3 + $0x14] sm:$0x1] %v1217
      %v1219 = vld [vmem:[#allocation3 + $0x1c] sm:$0x1]
      %v1220 = vsel %vm1209, 0, %v1219
      %1221 = vst [vmem:[#allocation3 + $0x1c] sm:$0x1] %v1220
      %v1222 = vld [vmem:[#allocation3 + $0x24] sm:$0x1]
      %v1223 = vsel %vm1209, 0, %v1222
      %1224 = vst [vmem:[#allocation3 + $0x24] sm:$0x1] %v1223
      %v1225 = vld [vmem:[#allocation3 + $0x2c] sm:$0x1]
      %v1226 = vsel %vm1209, 0, %v1225
      %1227 = vst [vmem:[#allocation3 + $0x2c] sm:$0x1] %v1226
      %p1228 = scmp.eq.s32.totalorder %s21, 0
      // Predicated region
      $region41: #{down_forward.1} parent=39 // pred_check
        %p1229 = pneg %p1228
      $region42: #{down_forward.1} parent=39 // pred_check_branch
        %1231 = sbr.rel (%p1229) target = $region44
      $region43: #{down_forward.1} parent=39 // pred_region
        %vm1232 = vcmask 60416
        %1233 = vst.msk [vmem:[#allocation3] sm:$0xf] %vm1232, 0
        %vm1234 = vcmask 57344
        %1235 = vst.msk [vmem:[#allocation3 + $0x4] sm:$0x1] %vm1234, 0
      $region44: #{down_forward.1} parent=39 // pred_fallthru
        _
      %p1236 = scmp.eq.s32.totalorder %s21, 1
      // Predicated region
      $region45: #{down_forward.1} parent=39 // pred_check
        %p1237 = pneg %p1236
      $region46: #{down_forward.1} parent=39 // pred_check_branch
        %1239 = sbr.rel (%p1237) target = $region48
      $region47: #{down_forward.1} parent=39 // pred_region
        %s1240 = scalar_lea.vmem [#allocation3], 40
        %vm1241 = vcmask 60416
        %1242 = vst.msk [vmem:[%s1240] sm:$0xf] %vm1241, 0
        %vm1243 = vcmask 57344
        %1244 = vst.msk [vmem:[%s1240 + $0x4] sm:$0x1] %vm1243, 0
      $region48: #{down_forward.1} parent=39 // pred_fallthru
        _
      %v1245 = vld [vmem:[#allocation3] sm:$0xf]
      %v1246 = vld [vmem:[#allocation3 + $0x8] sm:$0xf]
      %v1247 = vld [vmem:[#allocation3 + $0x10] sm:$0xf]
      %v1248 = vld [vmem:[#allocation3 + $0x18] sm:$0xf]
      %vm1249 = vcmask 60416
      %1250 = vst.msk [vmem:[#allocation4] sm:$0xf] %vm1249, %v1245
      %1251 = vst.msk [vmem:[#allocation4 + $0x4] sm:$0xf] %vm1249, %v1246
      %1252 = vst.msk [vmem:[#allocation4 + $0x8] sm:$0xf] %vm1249, %v1247
      %1253 = vst.msk [vmem:[#allocation4 + $0xc] sm:$0xf] %vm1249, %v1248
      %v1254 = vld [vmem:[#allocation3] sm:$0xf]
      %v1255 = vld [vmem:[#allocation3 + $0x4] sm:$0x1]
      %v1256 = vld [vmem:[#allocation3 + $0x8] sm:$0xf]
      %v1257 = vld [vmem:[#allocation3 + $0xc] sm:$0x1]
      %v1258 = vld [vmem:[#allocation3 + $0x10] sm:$0xf]
      %v1259 = vld [vmem:[#allocation3 + $0x14] sm:$0x1]
      %v1260 = vld [vmem:[#allocation3 + $0x18] sm:$0xf]
      %v1261 = vld [vmem:[#allocation3 + $0x1c] sm:$0x1]
      %v1263 = vshrl.u32 %v1254, 16
      %v1265 = vrot.slane %v1263, 4
      %v1266 = vshll.u32 %v1254, 16
      %v1268 = vrot.slane %v1266, 5
      %v1269 = vor.u32 %v1265, %v1268
      %v1270 = vrot.slane %v1269, 4
      %v1272 = vshll.u32 %v1255, 16
      %v1274 = vrot.slane %v1272, 5
      %v1275 = vsel %vm290, %v1270, %v1274
      %v1277 = vshrl.u32 %v1256, 16
      %v1279 = vrot.slane %v1277, 4
      %v1280 = vshll.u32 %v1256, 16
      %v1282 = vrot.slane %v1280, 5
      %v1283 = vor.u32 %v1279, %v1282
      %v1284 = vrot.slane %v1283, 4
      %v1286 = vshll.u32 %v1257, 16
      %v1288 = vrot.slane %v1286, 5
      %v1289 = vsel %vm290, %v1284, %v1288
      %v1291 = vshrl.u32 %v1258, 16
      %v1293 = vrot.slane %v1291, 4
      %v1294 = vshll.u32 %v1258, 16
      %v1296 = vrot.slane %v1294, 5
      %v1297 = vor.u32 %v1293, %v1296
      %v1298 = vrot.slane %v1297, 4
      %v1300 = vshll.u32 %v1259, 16
      %v1302 = vrot.slane %v1300, 5
      %v1303 = vsel %vm290, %v1298, %v1302
      %v1305 = vshrl.u32 %v1260, 16
      %v1307 = vrot.slane %v1305, 4
      %v1308 = vshll.u32 %v1260, 16
      %v1310 = vrot.slane %v1308, 5
      %v1311 = vor.u32 %v1307, %v1310
      %v1312 = vrot.slane %v1311, 4
      %v1314 = vshll.u32 %v1261, 16
      %v1316 = vrot.slane %v1314, 5
      %v1317 = vsel %vm290, %v1312, %v1316
      %1318 = vrot.lane.b32.xlu0 %v1275, 8
      %v1319 = vpop.permute.xlu0 %1318
      %1320 = vrot.lane.b32.xlu0 %v1289, 8
      %v1321 = vpop.permute.xlu0 %1320
      %1322 = vrot.lane.b32.xlu0 %v1303, 8
      %v1323 = vpop.permute.xlu0 %1322
      %1324 = vrot.lane.b32.xlu0 %v1317, 8
      %v1325 = vpop.permute.xlu0 %1324
      %vm1330 = vcmask 126016
      %1331 = vst.msk [vmem:[#allocation4] sm:$0xf] %vm1330, %v1319
      %1332 = vst.msk [vmem:[#allocation4 + $0x4] sm:$0xf] %vm1330, %v1321
      %1333 = vst.msk [vmem:[#allocation4 + $0x8] sm:$0xf] %vm1330, %v1323
      %1334 = vst.msk [vmem:[#allocation4 + $0xc] sm:$0xf] %vm1330, %v1325
      %v1335 = vld [vmem:[#allocation3] sm:$0xe]
      %v1336 = vld [vmem:[#allocation3 + $0x4] sm:$0x1]
      %v1337 = vld [vmem:[#allocation3 + $0x8] sm:$0xe]
      %v1338 = vld [vmem:[#allocation3 + $0xc] sm:$0x1]
      %v1339 = vld [vmem:[#allocation3 + $0x10] sm:$0xe]
      %v1340 = vld [vmem:[#allocation3 + $0x14] sm:$0x1]
      %v1341 = vld [vmem:[#allocation3 + $0x18] sm:$0xe]
      %v1342 = vld [vmem:[#allocation3 + $0x1c] sm:$0x1]
      %v1351 = vrot.slane %v1335, 5
      %v1352 = vrot.slane %v1351, 4
      %v1353 = vrot.slane %v1336, 5
      %v1354 = vsel %vm426, %v1352, %v1353
      %v1355 = vrot.slane %v1337, 5
      %v1356 = vrot.slane %v1355, 4
      %v1357 = vrot.slane %v1338, 5
      %v1358 = vsel %vm426, %v1356, %v1357
      %v1359 = vrot.slane %v1339, 5
      %v1360 = vrot.slane %v1359, 4
      %v1361 = vrot.slane %v1340, 5
      %v1362 = vsel %vm426, %v1360, %v1361
      %v1363 = vrot.slane %v1341, 5
      %v1364 = vrot.slane %v1363, 4
      %v1365 = vrot.slane %v1342, 5
      %v1366 = vsel %vm426, %v1364, %v1365
      %1367 = vrot.lane.b32.xlu0 %v1354, 16
      %v1368 = vpop.permute.xlu0 %1367
      %1369 = vrot.lane.b32.xlu0 %v1358, 16
      %v1370 = vpop.permute.xlu0 %1369
      %1371 = vrot.lane.b32.xlu0 %v1362, 16
      %v1372 = vpop.permute.xlu0 %1371
      %1373 = vrot.lane.b32.xlu0 %v1366, 16
      %v1374 = vpop.permute.xlu0 %1373
      %vm1379 = vcmask 191616
      %1380 = vst.msk [vmem:[#allocation4] sm:$0xf] %vm1379, %v1368
      %1381 = vst.msk [vmem:[#allocation4 + $0x4] sm:$0xf] %vm1379, %v1370
      %1382 = vst.msk [vmem:[#allocation4 + $0x8] sm:$0xf] %vm1379, %v1372
      %1383 = vst.msk [vmem:[#allocation4 + $0xc] sm:$0xf] %vm1379, %v1374
      %s1384 = scalar_lea.vmem [#allocation3], 8
      %v1385 = vld [vmem:[%s1384] sm:$0xf]
      %v1386 = vld [vmem:[%s1384 + $0x8] sm:$0xf]
      %v1387 = vld [vmem:[%s1384 + $0x10] sm:$0xf]
      %v1388 = vld [vmem:[%s1384 + $0x18] sm:$0xf]
      %1393 = vrot.lane.b32.xlu0 %v1385, 24
      %v1394 = vpop.permute.xlu0 %1393
      %1395 = vrot.lane.b32.xlu0 %v1386, 24
      %v1396 = vpop.permute.xlu0 %1395
      %1397 = vrot.lane.b32.xlu0 %v1387, 24
      %v1398 = vpop.permute.xlu0 %1397
      %1399 = vrot.lane.b32.xlu0 %v1388, 24
      %v1400 = vpop.permute.xlu0 %1399
      %vm1405 = vcmask 257216
      %1406 = vst.msk [vmem:[#allocation4] sm:$0xf] %vm1405, %v1394
      %1407 = vst.msk [vmem:[#allocation4 + $0x4] sm:$0xf] %vm1405, %v1396
      %1408 = vst.msk [vmem:[#allocation4 + $0x8] sm:$0xf] %vm1405, %v1398
      %1409 = vst.msk [vmem:[#allocation4 + $0xc] sm:$0xf] %vm1405, %v1400
      %v1410 = vld [vmem:[%s1384] sm:$0xf]
      %v1411 = vld [vmem:[%s1384 + $0x4] sm:$0x1]
      %v1412 = vld [vmem:[%s1384 + $0x8] sm:$0xf]
      %v1413 = vld [vmem:[%s1384 + $0xc] sm:$0x1]
      %v1414 = vld [vmem:[%s1384 + $0x10] sm:$0xf]
      %v1415 = vld [vmem:[%s1384 + $0x14] sm:$0x1]
      %v1416 = vld [vmem:[%s1384 + $0x18] sm:$0xf]
      %v1417 = vld [vmem:[%s1384 + $0x1c] sm:$0x1]
      %v1419 = vshrl.u32 %v1410, 16
      %v1421 = vrot.slane %v1419, 4
      %v1422 = vshll.u32 %v1410, 16
      %v1424 = vrot.slane %v1422, 5
      %v1425 = vor.u32 %v1421, %v1424
      %v1426 = vrot.slane %v1425, 4
      %v1428 = vshll.u32 %v1411, 16
      %v1430 = vrot.slane %v1428, 5
      %v1431 = vsel %vm290, %v1426, %v1430
      %v1433 = vshrl.u32 %v1412, 16
      %v1435 = vrot.slane %v1433, 4
      %v1436 = vshll.u32 %v1412, 16
      %v1438 = vrot.slane %v1436, 5
      %v1439 = vor.u32 %v1435, %v1438
      %v1440 = vrot.slane %v1439, 4
      %v1442 = vshll.u32 %v1413, 16
      %v1444 = vrot.slane %v1442, 5
      %v1445 = vsel %vm290, %v1440, %v1444
      %v1447 = vshrl.u32 %v1414, 16
      %v1449 = vrot.slane %v1447, 4
      %v1450 = vshll.u32 %v1414, 16
      %v1452 = vrot.slane %v1450, 5
      %v1453 = vor.u32 %v1449, %v1452
      %v1454 = vrot.slane %v1453, 4
      %v1456 = vshll.u32 %v1415, 16
      %v1458 = vrot.slane %v1456, 5
      %v1459 = vsel %vm290, %v1454, %v1458
      %v1461 = vshrl.u32 %v1416, 16
      %v1463 = vrot.slane %v1461, 4
      %v1464 = vshll.u32 %v1416, 16
      %v1466 = vrot.slane %v1464, 5
      %v1467 = vor.u32 %v1463, %v1466
      %v1468 = vrot.slane %v1467, 4
      %v1470 = vshll.u32 %v1417, 16
      %v1472 = vrot.slane %v1470, 5
      %v1473 = vsel %vm290, %v1468, %v1472
      %1474 = vrot.lane.b32.xlu0 %v1431, 32
      %v1475 = vpop.permute.xlu0 %1474
      %1476 = vrot.lane.b32.xlu0 %v1445, 32
      %v1477 = vpop.permute.xlu0 %1476
      %1478 = vrot.lane.b32.xlu0 %v1459, 32
      %v1479 = vpop.permute.xlu0 %1478
      %1480 = vrot.lane.b32.xlu0 %v1473, 32
      %v1481 = vpop.permute.xlu0 %1480
      %vm1486 = vcmask 322816
      %1487 = vst.msk [vmem:[#allocation4] sm:$0xf] %vm1486, %v1475
      %1488 = vst.msk [vmem:[#allocation4 + $0x4] sm:$0xf] %vm1486, %v1477
      %1489 = vst.msk [vmem:[#allocation4 + $0x8] sm:$0xf] %vm1486, %v1479
      %1490 = vst.msk [vmem:[#allocation4 + $0xc] sm:$0xf] %vm1486, %v1481
      %v1491 = vld [vmem:[%s1384] sm:$0xe]
      %v1492 = vld [vmem:[%s1384 + $0x4] sm:$0x1]
      %v1493 = vld [vmem:[%s1384 + $0x8] sm:$0xe]
      %v1494 = vld [vmem:[%s1384 + $0xc] sm:$0x1]
      %v1495 = vld [vmem:[%s1384 + $0x10] sm:$0xe]
      %v1496 = vld [vmem:[%s1384 + $0x14] sm:$0x1]
      %v1497 = vld [vmem:[%s1384 + $0x18] sm:$0xe]
      %v1498 = vld [vmem:[%s1384 + $0x1c] sm:$0x1]
      %v1507 = vrot.slane %v1491, 5
      %v1508 = vrot.slane %v1507, 4
      %v1509 = vrot.slane %v1492, 5
      %v1510 = vsel %vm426, %v1508, %v1509
      %v1511 = vrot.slane %v1493, 5
      %v1512 = vrot.slane %v1511, 4
      %v1513 = vrot.slane %v1494, 5
      %v1514 = vsel %vm426, %v1512, %v1513
      %v1515 = vrot.slane %v1495, 5
      %v1516 = vrot.slane %v1515, 4
      %v1517 = vrot.slane %v1496, 5
      %v1518 = vsel %vm426, %v1516, %v1517
      %v1519 = vrot.slane %v1497, 5
      %v1520 = vrot.slane %v1519, 4
      %v1521 = vrot.slane %v1498, 5
      %v1522 = vsel %vm426, %v1520, %v1521
      %1523 = vrot.lane.b32.xlu0 %v1510, 40
      %v1524 = vpop.permute.xlu0 %1523
      %1525 = vrot.lane.b32.xlu0 %v1514, 40
      %v1526 = vpop.permute.xlu0 %1525
      %1527 = vrot.lane.b32.xlu0 %v1518, 40
      %v1528 = vpop.permute.xlu0 %1527
      %1529 = vrot.lane.b32.xlu0 %v1522, 40
      %v1530 = vpop.permute.xlu0 %1529
      %vm1535 = vcmask 388416
      %1536 = vst.msk [vmem:[#allocation4] sm:$0xf] %vm1535, %v1524
      %1537 = vst.msk [vmem:[#allocation4 + $0x4] sm:$0xf] %vm1535, %v1526
      %1538 = vst.msk [vmem:[#allocation4 + $0x8] sm:$0xf] %vm1535, %v1528
      %1539 = vst.msk [vmem:[#allocation4 + $0xc] sm:$0xf] %vm1535, %v1530
      %s1540 = scalar_lea.vmem [#allocation3], 16
      %v1541 = vld [vmem:[%s1540] sm:$0xf]
      %v1542 = vld [vmem:[%s1540 + $0x8] sm:$0xf]
      %v1543 = vld [vmem:[%s1540 + $0x10] sm:$0xf]
      %v1544 = vld [vmem:[%s1540 + $0x18] sm:$0xf]
      %1549 = vrot.lane.b32.xlu0 %v1541, 48
      %v1550 = vpop.permute.xlu0 %1549
      %1551 = vrot.lane.b32.xlu0 %v1542, 48
      %v1552 = vpop.permute.xlu0 %1551
      %1553 = vrot.lane.b32.xlu0 %v1543, 48
      %v1554 = vpop.permute.xlu0 %1553
      %1555 = vrot.lane.b32.xlu0 %v1544, 48
      %v1556 = vpop.permute.xlu0 %1555
      %vm1561 = vcmask 454016
      %1562 = vst.msk [vmem:[#allocation4] sm:$0xf] %vm1561, %v1550
      %1563 = vst.msk [vmem:[#allocation4 + $0x4] sm:$0xf] %vm1561, %v1552
      %1564 = vst.msk [vmem:[#allocation4 + $0x8] sm:$0xf] %vm1561, %v1554
      %1565 = vst.msk [vmem:[#allocation4 + $0xc] sm:$0xf] %vm1561, %v1556
      %v1566 = vld [vmem:[%s1540] sm:$0xf]
      %v1567 = vld [vmem:[%s1540 + $0x4] sm:$0x1]
      %v1568 = vld [vmem:[%s1540 + $0x8] sm:$0xf]
      %v1569 = vld [vmem:[%s1540 + $0xc] sm:$0x1]
      %v1570 = vld [vmem:[%s1540 + $0x10] sm:$0xf]
      %v1571 = vld [vmem:[%s1540 + $0x14] sm:$0x1]
      %v1572 = vld [vmem:[%s1540 + $0x18] sm:$0xf]
      %v1573 = vld [vmem:[%s1540 + $0x1c] sm:$0x1]
      %v1575 = vshrl.u32 %v1566, 16
      %v1577 = vrot.slane %v1575, 4
      %v1578 = vshll.u32 %v1566, 16
      %v1580 = vrot.slane %v1578, 5
      %v1581 = vor.u32 %v1577, %v1580
      %v1582 = vrot.slane %v1581, 4
      %v1584 = vshll.u32 %v1567, 16
      %v1586 = vrot.slane %v1584, 5
      %v1587 = vsel %vm290, %v1582, %v1586
      %v1589 = vshrl.u32 %v1568, 16
      %v1591 = vrot.slane %v1589, 4
      %v1592 = vshll.u32 %v1568, 16
      %v1594 = vrot.slane %v1592, 5
      %v1595 = vor.u32 %v1591, %v1594
      %v1596 = vrot.slane %v1595, 4
      %v1598 = vshll.u32 %v1569, 16
      %v1600 = vrot.slane %v1598, 5
      %v1601 = vsel %vm290, %v1596, %v1600
      %v1603 = vshrl.u32 %v1570, 16
      %v1605 = vrot.slane %v1603, 4
      %v1606 = vshll.u32 %v1570, 16
      %v1608 = vrot.slane %v1606, 5
      %v1609 = vor.u32 %v1605, %v1608
      %v1610 = vrot.slane %v1609, 4
      %v1612 = vshll.u32 %v1571, 16
      %v1614 = vrot.slane %v1612, 5
      %v1615 = vsel %vm290, %v1610, %v1614
      %v1617 = vshrl.u32 %v1572, 16
      %v1619 = vrot.slane %v1617, 4
      %v1620 = vshll.u32 %v1572, 16
      %v1622 = vrot.slane %v1620, 5
      %v1623 = vor.u32 %v1619, %v1622
      %v1624 = vrot.slane %v1623, 4
      %v1626 = vshll.u32 %v1573, 16
      %v1628 = vrot.slane %v1626, 5
      %v1629 = vsel %vm290, %v1624, %v1628
      %1630 = vrot.lane.b32.xlu0 %v1587, 56
      %v1631 = vpop.permute.xlu0 %1630
      %1632 = vrot.lane.b32.xlu0 %v1601, 56
      %v1633 = vpop.permute.xlu0 %1632
      %1634 = vrot.lane.b32.xlu0 %v1615, 56
      %v1635 = vpop.permute.xlu0 %1634
      %1636 = vrot.lane.b32.xlu0 %v1629, 56
      %v1637 = vpop.permute.xlu0 %1636
      %vm1642 = vcmask 519616
      %1643 = vst.msk [vmem:[#allocation4] sm:$0xf] %vm1642, %v1631
      %1644 = vst.msk [vmem:[#allocation4 + $0x4] sm:$0xf] %vm1642, %v1633
      %1645 = vst.msk [vmem:[#allocation4 + $0x8] sm:$0xf] %vm1642, %v1635
      %1646 = vst.msk [vmem:[#allocation4 + $0xc] sm:$0xf] %vm1642, %v1637
      %v1647 = vld [vmem:[%s1540] sm:$0xe]
      %v1648 = vld [vmem:[%s1540 + $0x4] sm:$0x1]
      %v1649 = vld [vmem:[%s1540 + $0x8] sm:$0xe]
      %v1650 = vld [vmem:[%s1540 + $0xc] sm:$0x1]
      %v1651 = vld [vmem:[%s1540 + $0x10] sm:$0xe]
      %v1652 = vld [vmem:[%s1540 + $0x14] sm:$0x1]
      %v1653 = vld [vmem:[%s1540 + $0x18] sm:$0xe]
      %v1654 = vld [vmem:[%s1540 + $0x1c] sm:$0x1]
      %v1663 = vrot.slane %v1647, 5
      %v1664 = vrot.slane %v1663, 4
      %v1665 = vrot.slane %v1648, 5
      %v1666 = vsel %vm426, %v1664, %v1665
      %v1667 = vrot.slane %v1649, 5
      %v1668 = vrot.slane %v1667, 4
      %v1669 = vrot.slane %v1650, 5
      %v1670 = vsel %vm426, %v1668, %v1669
      %v1671 = vrot.slane %v1651, 5
      %v1672 = vrot.slane %v1671, 4
      %v1673 = vrot.slane %v1652, 5
      %v1674 = vsel %vm426, %v1672, %v1673
      %v1675 = vrot.slane %v1653, 5
      %v1676 = vrot.slane %v1675, 4
      %v1677 = vrot.slane %v1654, 5
      %v1678 = vsel %vm426, %v1676, %v1677
      %1679 = vrot.lane.b32.xlu0 %v1666, 64
      %v1680 = vpop.permute.xlu0 %1679
      %1681 = vrot.lane.b32.xlu0 %v1670, 64
      %v1682 = vpop.permute.xlu0 %1681
      %1683 = vrot.lane.b32.xlu0 %v1674, 64
      %v1684 = vpop.permute.xlu0 %1683
      %1685 = vrot.lane.b32.xlu0 %v1678, 64
      %v1686 = vpop.permute.xlu0 %1685
      %vm1691 = vcmask 585216
      %1692 = vst.msk [vmem:[#allocation4] sm:$0xf] %vm1691, %v1680
      %1693 = vst.msk [vmem:[#allocation4 + $0x4] sm:$0xf] %vm1691, %v1682
      %1694 = vst.msk [vmem:[#allocation4 + $0x8] sm:$0xf] %vm1691, %v1684
      %1695 = vst.msk [vmem:[#allocation4 + $0xc] sm:$0xf] %vm1691, %v1686
      %v1696 = vld [vmem:[#allocation4] sm:$0xf]
      %v1697 = vld [vmem:[#allocation4 + $0x4] sm:$0xf]
      %v1698 = vld [vmem:[#allocation4 + $0x8] sm:$0xf]
      %v1699 = vld [vmem:[#allocation4 + $0xc] sm:$0xf]
      %v1700 = vld [vmem:[%s3] sm:$0xf]
      %v1701 = vld [vmem:[%s3 + $0x4] sm:$0xf]
      %v1702 = vld [vmem:[%s3 + $0x8] sm:$0xf]
      %v1703 = vld [vmem:[%s3 + $0xc] sm:$0xf]
      %v1704 = vld [vmem:[%s3 + $0x10] sm:$0xf]
      %v1705 = vld [vmem:[%s3 + $0x14] sm:$0xf]
      %v1706 = vld [vmem:[%s3 + $0x18] sm:$0xf]
      %v1707 = vld [vmem:[%s3 + $0x1c] sm:$0xf]
      %v1708 = vld [vmem:[%s3 + $0x20] sm:$0xf]
      %v1709 = vld [vmem:[%s4] sm:$0x1]
      %v1711 = vlaneseq
      %v1712 = vshrl.u32 %v1711, 7
      %v1713 = vsub.s32 0, %v1712
      %v1714 = vrot.slane %v1709, %v1713
      %v1720 = vunpack.c.l.b16 %v1696
      %v1721 = vunpack.c.l.b16 %v1697
      %v1722 = vunpack.c.l.b16 %v1698
      %v1723 = vunpack.c.l.b16 %v1699
      %v1724 = vpack.c.b16 %v1721, %v1720
      %v1725 = vpack.c.b16 %v1723, %v1722
      %v1735 = vunpack.c.l.b16 %v1700
      %v1736 = vunpack.c.l.b16 %v1701
      %v1737 = vunpack.c.l.b16 %v1702
      %v1738 = vunpack.c.l.b16 %v1703
      %v1739 = vunpack.c.l.b16 %v1704
      %v1740 = vunpack.c.l.b16 %v1705
      %v1741 = vunpack.c.l.b16 %v1706
      %v1742 = vunpack.c.l.b16 %v1707
      %v1743 = vunpack.c.l.b16 %v1708
      %v1744 = vpack.c.b16 %v1736, %v1735
      %v1745 = vpack.c.b16 %v1738, %v1737
      %v1746 = vpack.c.b16 %v1740, %v1739
      %v1747 = vpack.c.b16 %v1742, %v1741
      %v1748 = vpack.c.b16 %v1743, %v1743
      %vm1753 = vcmask 588800
      %v1755 = vsel %vm1753, %v1724, 0
      %v1758 = vsel %vm1753, %v1725, 0
      %vm1760 = vcmask 1043456
      %v1762 = vsel %vm1760, %v1748, 0
      %1764 = vmatprep.subr.bf16.mxu0 0
      %1765 = vmatpush1.bf16.msra.mxu0 %v1744
      %1766 = vmatprep.subr.bf16.mxu0 0
      %1767 = vmatpush1.bf16.msra.mxu0 %v1745
      %1768 = vmatprep.subr.bf16.mxu0 0
      %1769 = vmatpush1.bf16.msra.mxu0 %v1746
      %1770 = vmatprep.subr.bf16.mxu0 0
      %1771 = vmatpush1.bf16.msra.mxu0 %v1747
      %1772 = vmatprep.subr.bf16.mxu0 0
      %1773 = vmatpush1.bf16.msra.mxu0 %v1762
      %1774 = vmatprep.subr.bf16.mxu0 0
      %1775 = vmatpush1.bf16.msra.mxu0 0
      %1776 = vmatprep.subr.bf16.mxu0 0
      %1777 = vmatpush1.bf16.msra.mxu0 0
      %1778 = vmatprep.subr.bf16.mxu0 0
      %1779 = vmatpush1.bf16.msra.mxu0 0
      %1780 = vmatprep.subr.bf16.mxu0 0
      %1781 = vmatpush1.bf16.msra.mxu0 0
      %1782 = vmatprep.subr.bf16.mxu0 0
      %1783 = vmatpush1.bf16.msra.mxu0 0
      %1784 = vmatprep.subr.bf16.mxu0 0
      %1785 = vmatpush1.bf16.msra.mxu0 0
      %1786 = vmatprep.subr.bf16.mxu0 0
      %1787 = vmatpush1.bf16.msra.mxu0 0
      %1788 = vmatprep.subr.bf16.mxu0 0
      %1789 = vmatpush1.bf16.msra.mxu0 0
      %1790 = vmatprep.subr.bf16.mxu0 0
      %1791 = vmatpush1.bf16.msra.mxu0 0
      %1792 = vmatprep.subr.bf16.mxu0 0
      %1793 = vmatpush1.bf16.msra.mxu0 0
      %1794 = vmatprep.subr.bf16.mxu0 0
      %1795 = vmatpush1.bf16.msra.mxu0 0
      %1796 = vmatprep.mubr.bf16.mxu0 0
      %1797 = vmatmul.mubr.bf16.gmra.mrb[0].mxu0 %v1755
      %v1798 = vpop.f32.mrb[0].mxu0
      %v1799 = vadd.f32 %v1714, %v1798
      %v1800 = vpop.f32.mrb[0].mxu0
      %v1801 = vpop.f32.mrb[0].mxu0
      %v1802 = vadd.f32 %v1714, %v1801
      %v1803 = vpop.f32.mrb[0].mxu0
      %1804 = vmatprep.mubr.bf16.mxu0 0
      %1805 = vmatmul.mubr.bf16.gmra.mrb[0].mxu0 %v1758
      %v1806 = vpop.f32.mrb[0].mxu0
      %v1807 = vadd.f32 %v1714, %v1806
      %v1808 = vpop.f32.mrb[0].mxu0
      %v1809 = vpop.f32.mrb[0].mxu0
      %v1810 = vadd.f32 %v1714, %v1809
      %v1811 = vpop.f32.mrb[0].mxu0
      %1812 = vdwg.mxu0
      %v1813 = vmax.f32 %v1799, 0.0
      %v1814 = vmax.f32 %v1802, 0.0
      %v1815 = vmax.f32 %v1807, 0.0
      %v1816 = vmax.f32 %v1810, 0.0
      %vm1817 = vcmask 64512
      %1818 = vst.msk [vmem:[%s260] sm:$0xff] %vm1817, %v1813
      %1819 = vst.msk [vmem:[%s260 + $0x8] sm:$0xff] %vm1817, %v1814
      %1820 = vst.msk [vmem:[%s260 + $0x10] sm:$0xff] %vm1817, %v1815
      %1821 = vst.msk [vmem:[%s260 + $0x18] sm:$0xff] %vm1817, %v1816
      %s1822 = smul.u32 4, %s21
      %p1823 = scmp.lt.s32.totalorder %s20, 1
      %s1824 = scalar_select %p1823, %s20, 1
      %p1825 = scmp.lt.s32.totalorder %s1822, 7
      %s1826 = scalar_select %p1825, %s1822, 7
      %s1827 = smul.addr %s1824, 8
      %s1828 = sadd.s32 %s1826, %s1827
      %s1829 = smul.addr %s1828, 8
      %s1830 = scalar_lea.vmem %s5, %s1829
      // Predicated region
      $region49: #{down_forward.1} parent=39 // pred_check
        %p1831 = pneg %p160
      $region50: #{down_forward.1} parent=39 // pred_check_branch
        %1833 = sbr.rel (%p1831) target = $region52
      $region51: #{down_forward.1} parent=39 // pred_region
        %s1834 = smul.u32 4, %s21
      $region52: #{down_forward.1} parent=39 // pred_fallthru
        _
    $region40: #{down_forward.1} parent=5 // pred_fallthru
      _
    %p1835 = scmp.le.s32.totalorder 2, %s11
    // Predicated region
    $region53: #{down_forward.1} parent=5 // pred_check
      %p1836 = pneg %p1835
    $region54: #{down_forward.1} parent=5 // pred_check_branch
      %1838 = sbr.rel (%p1836) target = $region56
    $region55: #{down_forward.1} parent=5 // pred_region
      %s1839 = ssub.s32 %s11, 2
      // Predicated region
      $region57: #{down_forward.1} parent=55 // pred_check
        %p1840 = pneg %p166
      $region58: #{down_forward.1} parent=55 // pred_check_branch
        %1842 = sbr.rel (%p1840) target = $region60
      $region59: #{down_forward.1} parent=55 // pred_region
        %s1843 = smul.u32 4, %s23
        %p1844 = scmp.lt.s32.totalorder %s22, 1
        %s1845 = scalar_select %p1844, %s22, 1
        %p1846 = scmp.lt.s32.totalorder %s1843, 7
        %s1847 = scalar_select %p1846, %s1843, 7
        %s1848 = smul.addr %s1845, 8
        %s1849 = sadd.s32 %s1847, %s1848
        %s1850 = smul.addr %s1849, 8
        %s1851 = scalar_lea.vmem %s5, %s1850
      $region60: #{down_forward.1} parent=55 // pred_fallthru
        _
    $region56: #{down_forward.1} parent=5 // pred_fallthru
      _
  $region6: #{down_forward.1} parent=0 // loop_footer
    %s15 = sadd.s32 1, %s11
  $region7: #{down_forward.1} parent=0 // loop_footer_branch
    %10 = sbr.rel target = $region3
  $region8: #{down_forward.1} parent=0 // loop_exit
    _

</llo_original>
